<compile_context>
chip_gen: v7x
topology: tpu7x:2x2x1
jax: 0.10.0
libtpu: 0.0.40
codegen_flags: <defaults>
</compile_context>

<pallas_src>
import jax
import jax.numpy as jnp
from jax import lax
from jax.experimental import pallas as pl
from jax.experimental.pallas import tpu as pltpu

# ---- small, module-consistent config (args.*) -------------------------------
VOCAB  = 50   # args.embed_num
EMBED  = 16   # args.embed_dim
HIDDEN = 32   # args.hidden_size
NCLASS = 4    # args.class_num
BATCH  = 2
SEQ    = 8
BP     = 8    # per-step batch rows padded to the 8-sublane granularity
# fused-table rows (fwd vocab | bwd vocab | bias row), padded to a lane-aligned K
TAB_ROWS = max(128, ((2 * VOCAB + 1 + 127) // 128) * 128)
# dropout is inference-identity (and self.dropout is never called in forward),
# so it is intentionally omitted.


def _make_kernel(T, B, H, V, tab_rows):
    """Build the fused BiLSTM kernel for static (T, B, H)."""
    H2 = 2 * H                       # stacked fwd|bwd hidden width
    R = T * BP                       # padded xproj rows

    def kernel(tokf_ref, tokb_ref, tab_ref, w_hh_ref, wout_ref, bout_ref,
               out_ref, xproj_ref):
        # --- fused embedding gather + input projection (+bias) --------------
        # multi-hot selector: row r hits (fwd-token row, V + bwd-token row,
        # bias row 2V) of the fused table -> ONE MXU matmul yields xproj for
        # all T steps and both directions with the bias folded in.
        iota = lax.broadcasted_iota(jnp.int32, (R, tab_rows), 1)
        hot = ((iota == tokf_ref[...]) | (iota == tokb_ref[...]) |
               (iota == 2 * V)).astype(jnp.float32)             # [R, tab_rows]
        xproj_ref[...] = jnp.dot(hot, tab_ref[...],
                                 preferred_element_type=jnp.float32)  # [R, 8H]

        w_hh = w_hh_ref[...]                                    # [2H, 8H]

        # --- merged fwd+bwd recurrence, fully unrolled ----------------------
        h = c = mx = None
        for k in range(T):                                      # static unroll
            xk = xproj_ref[k * BP:(k + 1) * BP, :]              # aligned slab
            if k == 0:
                g = xk                                          # h0 == 0
            else:
                g = jnp.dot(h, w_hh,
                            preferred_element_type=jnp.float32) + xk
            i_g = jax.nn.sigmoid(g[:, 0 * H2:1 * H2])           # [BP, 2H] each
            g_g = jnp.tanh(g[:, 2 * H2:3 * H2])
            o_g = jax.nn.sigmoid(g[:, 3 * H2:4 * H2])
            if k == 0:
                c = i_g * g_g                                   # c0 == 0
            else:
                f_g = jax.nn.sigmoid(g[:, 1 * H2:2 * H2])
                c = f_g * c + i_g * g_g
            h = o_g * jnp.tanh(c)
            mx = h if k == 0 else jnp.maximum(mx, h)            # tanh hoisted

        # tanh is monotonic: max_t tanh(h_t) == tanh(max_t h_t) -> one tanh.
        feat = jnp.tanh(mx)                                     # [BP, 2H] fwd|bwd
        logits = jnp.dot(feat, wout_ref[...],
                         preferred_element_type=jnp.float32) + bout_ref[...]
        logits = logits - jnp.max(logits, axis=-1, keepdims=True)
        e = jnp.exp(logits)
        probs = e / jnp.sum(e, axis=-1, keepdims=True)          # exact divide
        out_ref[...] = probs[:B, :]                             # drop pad rows

    return kernel


def prepare_params(params):
    """Static (parameter-prep time) re-layout: gate-interleaved fused weights
    plus the [2V+1, 8H] embedding+input-projection(+bias) table."""
    H, V = HIDDEN, VOCAB

    def interleave(a, b):
        # column order of the fused 8H gate axis:
        #   (i_f, i_b, f_f, f_b, g_f, g_b, o_f, o_b), each block H wide.
        lead = a.shape[:-1]
        a4 = a.reshape(*lead, 4, 1, H)
        b4 = b.reshape(*lead, 4, 1, H)
        return jnp.concatenate([a4, b4], axis=-2).reshape(*lead, 8 * H)

    z_ih = jnp.zeros_like(params["wih_f"])
    z_hh = jnp.zeros_like(params["whh_f"])

    # fused table: row v      -> embed[v] @ W_ih_fwd   (bwd gate cols are 0)
    #              row V + v  -> embed[v] @ W_ih_bwd   (fwd gate cols are 0)
    #              row 2V     -> combined bias (always hot)
    tab_f = params["embed"] @ interleave(params["wih_f"], z_ih)      # [V, 8H]
    tab_b = params["embed"] @ interleave(z_ih, params["wih_b"])      # [V, 8H]
    bias = interleave(params["b_f"], params["b_b"])                  # [1, 8H]
    tab = jnp.zeros((TAB_ROWS, 8 * H), jnp.float32)
    tab = tab.at[:V].set(tab_f).at[V:2 * V].set(tab_b).at[2 * V].set(bias[0])

    # block-diagonal hh weight: rows 0:H act on h_fwd, rows H:2H on h_bwd
    w_hh = jnp.concatenate([interleave(params["whh_f"], z_hh),
                            interleave(z_hh, params["whh_b"])], axis=0)  # [2H,8H]

    return {"tab": tab, "w_hh": w_hh,
            "wout": params["wout"], "bout": params["bout"]}


def bilstm_forward(tokens, kparams):
    """tokens: int32 [B, T] -> softmax probs [B, C]."""
    B, T = tokens.shape
    H = HIDDEN

    # Only tiny integer index prep remains outside the kernel (a few hundred
    # bytes of int32); no embedding gather / concat / float reshape glue.
    tok_f = jnp.zeros((T, BP), jnp.int32).at[:, :B].set(tokens.T)
    tok_b = jnp.zeros((T, BP), jnp.int32).at[:, :B].set(tokens[:, ::-1].T) + VOCAB
    tok_f = tok_f.reshape(T * BP, 1)
    tok_b = tok_b.reshape(T * BP, 1)

    kernel = _make_kernel(T, B, H, VOCAB, TAB_ROWS)
    args = (tok_f, tok_b, kparams["tab"], kparams["w_hh"],
            kparams["wout"], kparams["bout"])
    vmem = pl.BlockSpec(memory_space=pltpu.MemorySpace.VMEM)
    return pl.pallas_call(
        kernel,
        out_shape=jax.ShapeDtypeStruct((B, NCLASS), jnp.float32),
        in_specs=[vmem] * len(args),
        out_specs=vmem,
        scratch_shapes=[pltpu.VMEM((T * BP, 8 * H), jnp.float32)],
    )(*args)


def make_params(key):
    ks = jax.random.split(key, 8)
    s = 0.1
    return {
        "embed": jax.random.normal(ks[0], (VOCAB, EMBED), jnp.float32) * s,
        "wih_f": jax.random.normal(ks[1], (EMBED, 4 * HIDDEN), jnp.float32) * s,
        "whh_f": jax.random.normal(ks[2], (HIDDEN, 4 * HIDDEN), jnp.float32) * s,
        "b_f":   jax.random.normal(ks[3], (1, 4 * HIDDEN), jnp.float32) * s,
        "wih_b": jax.random.normal(ks[4], (EMBED, 4 * HIDDEN), jnp.float32) * s,
        "whh_b": jax.random.normal(ks[5], (HIDDEN, 4 * HIDDEN), jnp.float32) * s,
        "b_b":   jax.random.normal(ks[6], (1, 4 * HIDDEN), jnp.float32) * s,
        "wout":  jax.random.normal(ks[7], (2 * HIDDEN, NCLASS), jnp.float32) * s,
        "bout":  jnp.zeros((1, NCLASS), jnp.float32),
    }


def reference_forward(tokens, params):
    """Pure-JAX mirror of the PyTorch forward, for a correctness check."""
    emb = params["embed"][tokens]                                  # [B, T, E]

    def run_dir(x_seq, wih, whh, b):
        B, T, _ = x_seq.shape
        H = whh.shape[0]

        def step(carry, x_t):
            h, c = carry
            g = x_t @ wih + h @ whh + b
            i = jax.nn.sigmoid(g[:, :H])
            f = jax.nn.sigmoid(g[:, H:2 * H])
            gg = jnp.tanh(g[:, 2 * H:3 * H])
            o = jax.nn.sigmoid(g[:, 3 * H:])
            c = f * c + i * gg
            h = o * jnp.tanh(c)
            return (h, c), h

        init = (jnp.zeros((B, H)), jnp.zeros((B, H)))
        _, hs = lax.scan(step, init, jnp.transpose(x_seq, (1, 0, 2)))
        return jnp.transpose(hs, (1, 0, 2))                        # [B, T, H]

    h_f = run_dir(emb, params["wih_f"], params["whh_f"], params["b_f"][0])
    h_b = run_dir(emb[:, ::-1], params["wih_b"], params["whh_b"],
                  params["b_b"][0])[:, ::-1]
    out = jnp.tanh(jnp.concatenate([h_f, h_b], axis=-1))           # [B, T, 2H]
    pooled = jnp.max(out, axis=1)                                  # max_pool1d
    logits = pooled @ params["wout"] + params["bout"][0]
    return jax.nn.softmax(logits, axis=-1)


if __name__ == "__main__":
    key = jax.random.PRNGKey(0)
    k_tok, k_par = jax.random.split(key)
    tokens = jax.random.randint(k_tok, (BATCH, SEQ), 0, VOCAB, dtype=jnp.int32)
    params = make_params(k_par)
    kparams = prepare_params(params)          # static parameter-prep re-layout

    out = jax.block_until_ready(bilstm_forward(tokens, kparams))
    ref = jax.block_until_ready(reference_forward(tokens, params))

    assert out.shape == (BATCH, NCLASS), out.shape
    assert jnp.allclose(out, ref, atol=1e-4, rtol=1e-4), (out, ref)
    print("KERNEL_OK")
</pallas_src>

<mosaic_0001>
module attributes {stable_mosaic.version = 11 : i64} {
  func.func @kernel(%arg0: memref<64x1xi32, #tpu.memory_space<vmem>>, %arg1: memref<64x1xi32, #tpu.memory_space<vmem>>, %arg2: memref<128x256xf32, #tpu.memory_space<vmem>>, %arg3: memref<64x256xf32, #tpu.memory_space<vmem>>, %arg4: memref<64x4xf32, #tpu.memory_space<vmem>>, %arg5: memref<1x4xf32, #tpu.memory_space<vmem>>, %arg6: memref<2x4xf32, #tpu.memory_space<vmem>>, %arg7: memref<64x256xf32, #tpu.memory_space<vmem>>) attributes {dimension_semantics = [], scalar_prefetch = 0 : i64, scratch_operands = 1 : i64, tpu.core_type = #tpu.core_type<tc>} {
    %0 = tpu.iota {dimensions = array<i32: 1>} : vector<64x128xi32>
    %c0 = arith.constant 0 : index
    %c0_0 = arith.constant 0 : index
    %1 = vector.load %arg0[%c0, %c0_0] : memref<64x1xi32, #tpu.memory_space<vmem>>, vector<64x1xi32>
    %2 = vector.broadcast %1 : vector<64x1xi32> to vector<64x128xi32>
    %3 = arith.cmpi eq, %0, %2 : vector<64x128xi32>
    %c0_1 = arith.constant 0 : index
    %c0_2 = arith.constant 0 : index
    %4 = vector.load %arg1[%c0_1, %c0_2] : memref<64x1xi32, #tpu.memory_space<vmem>>, vector<64x1xi32>
    %5 = vector.broadcast %4 : vector<64x1xi32> to vector<64x128xi32>
    %6 = arith.cmpi eq, %0, %5 : vector<64x128xi32>
    %7 = arith.ori %3, %6 : vector<64x128xi1>
    %c100_i32 = arith.constant 100 : i32
    %8 = vector.broadcast %c100_i32 : i32 to vector<64x128xi32>
    %9 = arith.cmpi eq, %0, %8 : vector<64x128xi32>
    %10 = arith.ori %7, %9 : vector<64x128xi1>
    %11 = arith.extui %10 : vector<64x128xi1> to vector<64x128xi32>
    %12 = arith.sitofp %11 : vector<64x128xi32> to vector<64x128xf32>
    %c0_3 = arith.constant 0 : index
    %c0_4 = arith.constant 0 : index
    %13 = vector.load %arg2[%c0_3, %c0_4] : memref<128x256xf32, #tpu.memory_space<vmem>>, vector<128x256xf32>
    %cst = arith.constant dense<0.000000e+00> : vector<64x256xf32>
    %14 = tpu.matmul %12, %13, %cst {dimension_numbers = #tpu.dot_dimension_numbers<[1], [0], [0], [1], [0, 0, 1, 1], [], []>} : vector<64x128xf32>, vector<128x256xf32>, vector<64x256xf32> -> vector<64x256xf32>
    %c0_5 = arith.constant 0 : index
    %c0_6 = arith.constant 0 : index
    %15 = vector.load %arg7[%c0_5, %c0_6] : memref<64x256xf32, #tpu.memory_space<vmem>>, vector<64x256xf32>
    tpu.vector_store %arg7[%c0_5, %c0_6], %14 {strides = array<i32>} : memref<64x256xf32, #tpu.memory_space<vmem>>, vector<64x256xf32>,
    %c0_7 = arith.constant 0 : index
    %c0_8 = arith.constant 0 : index
    %16 = vector.load %arg3[%c0_7, %c0_8] : memref<64x256xf32, #tpu.memory_space<vmem>>, vector<64x256xf32>
    %c0_9 = arith.constant 0 : index
    %c0_10 = arith.constant 0 : index
    %17 = vector.load %arg7[%c0_9, %c0_10] : memref<64x256xf32, #tpu.memory_space<vmem>>, vector<8x256xf32>
    %18 = vector.extract_strided_slice %17 {offsets = [0, 0], sizes = [8, 64], strides = [1, 1]} : vector<8x256xf32> to vector<8x64xf32>
    %19 = arith.negf %18 : vector<8x64xf32>
    %20 = math.exp %19 : vector<8x64xf32>
    %cst_11 = arith.constant 1.000000e+00 : f32
    %21 = vector.broadcast %cst_11 : f32 to vector<8x64xf32>
    %22 = arith.addf %21, %20 : vector<8x64xf32>
    %23 = arith.divf %21, %22 : vector<8x64xf32>
    %24 = vector.extract_strided_slice %17 {offsets = [0, 128], sizes = [8, 64], strides = [1, 1]} : vector<8x256xf32> to vector<8x64xf32>
    %25 = math.tanh %24 : vector<8x64xf32>
    %26 = vector.extract_strided_slice %17 {offsets = [0, 192], sizes = [8, 64], strides = [1, 1]} : vector<8x256xf32> to vector<8x64xf32>
    %27 = arith.negf %26 : vector<8x64xf32>
    %28 = math.exp %27 : vector<8x64xf32>
    %cst_12 = arith.constant 1.000000e+00 : f32
    %29 = vector.broadcast %cst_12 : f32 to vector<8x64xf32>
    %30 = arith.addf %29, %28 : vector<8x64xf32>
    %31 = arith.divf %29, %30 : vector<8x64xf32>
    %32 = arith.mulf %23, %25 : vector<8x64xf32>
    %33 = math.tanh %32 : vector<8x64xf32>
    %34 = arith.mulf %31, %33 : vector<8x64xf32>
    %c8 = arith.constant 8 : index
    %c0_13 = arith.constant 0 : index
    %35 = vector.load %arg7[%c8, %c0_13] : memref<64x256xf32, #tpu.memory_space<vmem>>, vector<8x256xf32>
    %cst_14 = arith.constant dense<0.000000e+00> : vector<8x256xf32>
    %36 = tpu.matmul %34, %16, %cst_14 {dimension_numbers = #tpu.dot_dimension_numbers<[1], [0], [0], [1], [0, 0, 1, 1], [], []>} : vector<8x64xf32>, vector<64x256xf32>, vector<8x256xf32> -> vector<8x256xf32>
    %37 = arith.addf %36, %35 : vector<8x256xf32>
    %38 = vector.extract_strided_slice %37 {offsets = [0, 0], sizes = [8, 64], strides = [1, 1]} : vector<8x256xf32> to vector<8x64xf32>
    %39 = arith.negf %38 : vector<8x64xf32>
    %40 = math.exp %39 : vector<8x64xf32>
    %cst_15 = arith.constant 1.000000e+00 : f32
    %41 = vector.broadcast %cst_15 : f32 to vector<8x64xf32>
    %42 = arith.addf %41, %40 : vector<8x64xf32>
    %43 = arith.divf %41, %42 : vector<8x64xf32>
    %44 = vector.extract_strided_slice %37 {offsets = [0, 128], sizes = [8, 64], strides = [1, 1]} : vector<8x256xf32> to vector<8x64xf32>
    %45 = math.tanh %44 : vector<8x64xf32>
    %46 = vector.extract_strided_slice %37 {offsets = [0, 192], sizes = [8, 64], strides = [1, 1]} : vector<8x256xf32> to vector<8x64xf32>
    %47 = arith.negf %46 : vector<8x64xf32>
    %48 = math.exp %47 : vector<8x64xf32>
    %cst_16 = arith.constant 1.000000e+00 : f32
    %49 = vector.broadcast %cst_16 : f32 to vector<8x64xf32>
    %50 = arith.addf %49, %48 : vector<8x64xf32>
    %51 = arith.divf %49, %50 : vector<8x64xf32>
    %52 = vector.extract_strided_slice %37 {offsets = [0, 64], sizes = [8, 64], strides = [1, 1]} : vector<8x256xf32> to vector<8x64xf32>
    %53 = arith.negf %52 : vector<8x64xf32>
    %54 = math.exp %53 : vector<8x64xf32>
    %cst_17 = arith.constant 1.000000e+00 : f32
    %55 = vector.broadcast %cst_17 : f32 to vector<8x64xf32>
    %56 = arith.addf %55, %54 : vector<8x64xf32>
    %57 = arith.divf %55, %56 : vector<8x64xf32>
    %58 = arith.mulf %57, %32 : vector<8x64xf32>
    %59 = arith.mulf %43, %45 : vector<8x64xf32>
    %60 = arith.addf %58, %59 : vector<8x64xf32>
    %61 = math.tanh %60 : vector<8x64xf32>
    %62 = arith.mulf %51, %61 : vector<8x64xf32>
    %63 = arith.maximumf %34, %62 : vector<8x64xf32>
    %c16 = arith.constant 16 : index
    %c0_18 = arith.constant 0 : index
    %64 = vector.load %arg7[%c16, %c0_18] : memref<64x256xf32, #tpu.memory_space<vmem>>, vector<8x256xf32>
    %cst_19 = arith.constant dense<0.000000e+00> : vector<8x256xf32>
    %65 = tpu.matmul %62, %16, %cst_19 {dimension_numbers = #tpu.dot_dimension_numbers<[1], [0], [0], [1], [0, 0, 1, 1], [], []>} : vector<8x64xf32>, vector<64x256xf32>, vector<8x256xf32> -> vector<8x256xf32>
    %66 = arith.addf %65, %64 : vector<8x256xf32>
    %67 = vector.extract_strided_slice %66 {offsets = [0, 0], sizes = [8, 64], strides = [1, 1]} : vector<8x256xf32> to vector<8x64xf32>
    %68 = arith.negf %67 : vector<8x64xf32>
    %69 = math.exp %68 : vector<8x64xf32>
    %cst_20 = arith.constant 1.000000e+00 : f32
    %70 = vector.broadcast %cst_20 : f32 to vector<8x64xf32>
    %71 = arith.addf %70, %69 : vector<8x64xf32>
    %72 = arith.divf %70, %71 : vector<8x64xf32>
    %73 = vector.extract_strided_slice %66 {offsets = [0, 128], sizes = [8, 64], strides = [1, 1]} : vector<8x256xf32> to vector<8x64xf32>
    %74 = math.tanh %73 : vector<8x64xf32>
    %75 = vector.extract_strided_slice %66 {offsets = [0, 192], sizes = [8, 64], strides = [1, 1]} : vector<8x256xf32> to vector<8x64xf32>
    %76 = arith.negf %75 : vector<8x64xf32>
    %77 = math.exp %76 : vector<8x64xf32>
    %cst_21 = arith.constant 1.000000e+00 : f32
    %78 = vector.broadcast %cst_21 : f32 to vector<8x64xf32>
    %79 = arith.addf %78, %77 : vector<8x64xf32>
    %80 = arith.divf %78, %79 : vector<8x64xf32>
    %81 = vector.extract_strided_slice %66 {offsets = [0, 64], sizes = [8, 64], strides = [1, 1]} : vector<8x256xf32> to vector<8x64xf32>
    %82 = arith.negf %81 : vector<8x64xf32>
    %83 = math.exp %82 : vector<8x64xf32>
    %cst_22 = arith.constant 1.000000e+00 : f32
    %84 = vector.broadcast %cst_22 : f32 to vector<8x64xf32>
    %85 = arith.addf %84, %83 : vector<8x64xf32>
    %86 = arith.divf %84, %85 : vector<8x64xf32>
    %87 = arith.mulf %86, %60 : vector<8x64xf32>
    %88 = arith.mulf %72, %74 : vector<8x64xf32>
    %89 = arith.addf %87, %88 : vector<8x64xf32>
    %90 = math.tanh %89 : vector<8x64xf32>
    %91 = arith.mulf %80, %90 : vector<8x64xf32>
    %92 = arith.maximumf %63, %91 : vector<8x64xf32>
    %c24 = arith.constant 24 : index
    %c0_23 = arith.constant 0 : index
    %93 = vector.load %arg7[%c24, %c0_23] : memref<64x256xf32, #tpu.memory_space<vmem>>, vector<8x256xf32>
    %cst_24 = arith.constant dense<0.000000e+00> : vector<8x256xf32>
    %94 = tpu.matmul %91, %16, %cst_24 {dimension_numbers = #tpu.dot_dimension_numbers<[1], [0], [0], [1], [0, 0, 1, 1], [], []>} : vector<8x64xf32>, vector<64x256xf32>, vector<8x256xf32> -> vector<8x256xf32>
    %95 = arith.addf %94, %93 : vector<8x256xf32>
    %96 = vector.extract_strided_slice %95 {offsets = [0, 0], sizes = [8, 64], strides = [1, 1]} : vector<8x256xf32> to vector<8x64xf32>
    %97 = arith.negf %96 : vector<8x64xf32>
    %98 = math.exp %97 : vector<8x64xf32>
    %cst_25 = arith.constant 1.000000e+00 : f32
    %99 = vector.broadcast %cst_25 : f32 to vector<8x64xf32>
    %100 = arith.addf %99, %98 : vector<8x64xf32>
    %101 = arith.divf %99, %100 : vector<8x64xf32>
    %102 = vector.extract_strided_slice %95 {offsets = [0, 128], sizes = [8, 64], strides = [1, 1]} : vector<8x256xf32> to vector<8x64xf32>
    %103 = math.tanh %102 : vector<8x64xf32>
    %104 = vector.extract_strided_slice %95 {offsets = [0, 192], sizes = [8, 64], strides = [1, 1]} : vector<8x256xf32> to vector<8x64xf32>
    %105 = arith.negf %104 : vector<8x64xf32>
    %106 = math.exp %105 : vector<8x64xf32>
    %cst_26 = arith.constant 1.000000e+00 : f32
    %107 = vector.broadcast %cst_26 : f32 to vector<8x64xf32>
    %108 = arith.addf %107, %106 : vector<8x64xf32>
    %109 = arith.divf %107, %108 : vector<8x64xf32>
    %110 = vector.extract_strided_slice %95 {offsets = [0, 64], sizes = [8, 64], strides = [1, 1]} : vector<8x256xf32> to vector<8x64xf32>
    %111 = arith.negf %110 : vector<8x64xf32>
    %112 = math.exp %111 : vector<8x64xf32>
    %cst_27 = arith.constant 1.000000e+00 : f32
    %113 = vector.broadcast %cst_27 : f32 to vector<8x64xf32>
    %114 = arith.addf %113, %112 : vector<8x64xf32>
    %115 = arith.divf %113, %114 : vector<8x64xf32>
    %116 = arith.mulf %115, %89 : vector<8x64xf32>
    %117 = arith.mulf %101, %103 : vector<8x64xf32>
    %118 = arith.addf %116, %117 : vector<8x64xf32>
    %119 = math.tanh %118 : vector<8x64xf32>
    %120 = arith.mulf %109, %119 : vector<8x64xf32>
    %121 = arith.maximumf %92, %120 : vector<8x64xf32>
    %c32 = arith.constant 32 : index
    %c0_28 = arith.constant 0 : index
    %122 = vector.load %arg7[%c32, %c0_28] : memref<64x256xf32, #tpu.memory_space<vmem>>, vector<8x256xf32>
    %cst_29 = arith.constant dense<0.000000e+00> : vector<8x256xf32>
    %123 = tpu.matmul %120, %16, %cst_29 {dimension_numbers = #tpu.dot_dimension_numbers<[1], [0], [0], [1], [0, 0, 1, 1], [], []>} : vector<8x64xf32>, vector<64x256xf32>, vector<8x256xf32> -> vector<8x256xf32>
    %124 = arith.addf %123, %122 : vector<8x256xf32>
    %125 = vector.extract_strided_slice %124 {offsets = [0, 0], sizes = [8, 64], strides = [1, 1]} : vector<8x256xf32> to vector<8x64xf32>
    %126 = arith.negf %125 : vector<8x64xf32>
    %127 = math.exp %126 : vector<8x64xf32>
    %cst_30 = arith.constant 1.000000e+00 : f32
    %128 = vector.broadcast %cst_30 : f32 to vector<8x64xf32>
    %129 = arith.addf %128, %127 : vector<8x64xf32>
    %130 = arith.divf %128, %129 : vector<8x64xf32>
    %131 = vector.extract_strided_slice %124 {offsets = [0, 128], sizes = [8, 64], strides = [1, 1]} : vector<8x256xf32> to vector<8x64xf32>
    %132 = math.tanh %131 : vector<8x64xf32>
    %133 = vector.extract_strided_slice %124 {offsets = [0, 192], sizes = [8, 64], strides = [1, 1]} : vector<8x256xf32> to vector<8x64xf32>
    %134 = arith.negf %133 : vector<8x64xf32>
    %135 = math.exp %134 : vector<8x64xf32>
    %cst_31 = arith.constant 1.000000e+00 : f32
    %136 = vector.broadcast %cst_31 : f32 to vector<8x64xf32>
    %137 = arith.addf %136, %135 : vector<8x64xf32>
    %138 = arith.divf %136, %137 : vector<8x64xf32>
    %139 = vector.extract_strided_slice %124 {offsets = [0, 64], sizes = [8, 64], strides = [1, 1]} : vector<8x256xf32> to vector<8x64xf32>
    %140 = arith.negf %139 : vector<8x64xf32>
    %141 = math.exp %140 : vector<8x64xf32>
    %cst_32 = arith.constant 1.000000e+00 : f32
    %142 = vector.broadcast %cst_32 : f32 to vector<8x64xf32>
    %143 = arith.addf %142, %141 : vector<8x64xf32>
    %144 = arith.divf %142, %143 : vector<8x64xf32>
    %145 = arith.mulf %144, %118 : vector<8x64xf32>
    %146 = arith.mulf %130, %132 : vector<8x64xf32>
    %147 = arith.addf %145, %146 : vector<8x64xf32>
    %148 = math.tanh %147 : vector<8x64xf32>
    %149 = arith.mulf %138, %148 : vector<8x64xf32>
    %150 = arith.maximumf %121, %149 : vector<8x64xf32>
    %c40 = arith.constant 40 : index
    %c0_33 = arith.constant 0 : index
    %151 = vector.load %arg7[%c40, %c0_33] : memref<64x256xf32, #tpu.memory_space<vmem>>, vector<8x256xf32>
    %cst_34 = arith.constant dense<0.000000e+00> : vector<8x256xf32>
    %152 = tpu.matmul %149, %16, %cst_34 {dimension_numbers = #tpu.dot_dimension_numbers<[1], [0], [0], [1], [0, 0, 1, 1], [], []>} : vector<8x64xf32>, vector<64x256xf32>, vector<8x256xf32> -> vector<8x256xf32>
    %153 = arith.addf %152, %151 : vector<8x256xf32>
    %154 = vector.extract_strided_slice %153 {offsets = [0, 0], sizes = [8, 64], strides = [1, 1]} : vector<8x256xf32> to vector<8x64xf32>
    %155 = arith.negf %154 : vector<8x64xf32>
    %156 = math.exp %155 : vector<8x64xf32>
    %cst_35 = arith.constant 1.000000e+00 : f32
    %157 = vector.broadcast %cst_35 : f32 to vector<8x64xf32>
    %158 = arith.addf %157, %156 : vector<8x64xf32>
    %159 = arith.divf %157, %158 : vector<8x64xf32>
    %160 = vector.extract_strided_slice %153 {offsets = [0, 128], sizes = [8, 64], strides = [1, 1]} : vector<8x256xf32> to vector<8x64xf32>
    %161 = math.tanh %160 : vector<8x64xf32>
    %162 = vector.extract_strided_slice %153 {offsets = [0, 192], sizes = [8, 64], strides = [1, 1]} : vector<8x256xf32> to vector<8x64xf32>
    %163 = arith.negf %162 : vector<8x64xf32>
    %164 = math.exp %163 : vector<8x64xf32>
    %cst_36 = arith.constant 1.000000e+00 : f32
    %165 = vector.broadcast %cst_36 : f32 to vector<8x64xf32>
    %166 = arith.addf %165, %164 : vector<8x64xf32>
    %167 = arith.divf %165, %166 : vector<8x64xf32>
    %168 = vector.extract_strided_slice %153 {offsets = [0, 64], sizes = [8, 64], strides = [1, 1]} : vector<8x256xf32> to vector<8x64xf32>
    %169 = arith.negf %168 : vector<8x64xf32>
    %170 = math.exp %169 : vector<8x64xf32>
    %cst_37 = arith.constant 1.000000e+00 : f32
    %171 = vector.broadcast %cst_37 : f32 to vector<8x64xf32>
    %172 = arith.addf %171, %170 : vector<8x64xf32>
    %173 = arith.divf %171, %172 : vector<8x64xf32>
    %174 = arith.mulf %173, %147 : vector<8x64xf32>
    %175 = arith.mulf %159, %161 : vector<8x64xf32>
    %176 = arith.addf %174, %175 : vector<8x64xf32>
    %177 = math.tanh %176 : vector<8x64xf32>
    %178 = arith.mulf %167, %177 : vector<8x64xf32>
    %179 = arith.maximumf %150, %178 : vector<8x64xf32>
    %c48 = arith.constant 48 : index
    %c0_38 = arith.constant 0 : index
    %180 = vector.load %arg7[%c48, %c0_38] : memref<64x256xf32, #tpu.memory_space<vmem>>, vector<8x256xf32>
    %cst_39 = arith.constant dense<0.000000e+00> : vector<8x256xf32>
    %181 = tpu.matmul %178, %16, %cst_39 {dimension_numbers = #tpu.dot_dimension_numbers<[1], [0], [0], [1], [0, 0, 1, 1], [], []>} : vector<8x64xf32>, vector<64x256xf32>, vector<8x256xf32> -> vector<8x256xf32>
    %182 = arith.addf %181, %180 : vector<8x256xf32>
    %183 = vector.extract_strided_slice %182 {offsets = [0, 0], sizes = [8, 64], strides = [1, 1]} : vector<8x256xf32> to vector<8x64xf32>
    %184 = arith.negf %183 : vector<8x64xf32>
    %185 = math.exp %184 : vector<8x64xf32>
    %cst_40 = arith.constant 1.000000e+00 : f32
    %186 = vector.broadcast %cst_40 : f32 to vector<8x64xf32>
    %187 = arith.addf %186, %185 : vector<8x64xf32>
    %188 = arith.divf %186, %187 : vector<8x64xf32>
    %189 = vector.extract_strided_slice %182 {offsets = [0, 128], sizes = [8, 64], strides = [1, 1]} : vector<8x256xf32> to vector<8x64xf32>
    %190 = math.tanh %189 : vector<8x64xf32>
    %191 = vector.extract_strided_slice %182 {offsets = [0, 192], sizes = [8, 64], strides = [1, 1]} : vector<8x256xf32> to vector<8x64xf32>
    %192 = arith.negf %191 : vector<8x64xf32>
    %193 = math.exp %192 : vector<8x64xf32>
    %cst_41 = arith.constant 1.000000e+00 : f32
    %194 = vector.broadcast %cst_41 : f32 to vector<8x64xf32>
    %195 = arith.addf %194, %193 : vector<8x64xf32>
    %196 = arith.divf %194, %195 : vector<8x64xf32>
    %197 = vector.extract_strided_slice %182 {offsets = [0, 64], sizes = [8, 64], strides = [1, 1]} : vector<8x256xf32> to vector<8x64xf32>
    %198 = arith.negf %197 : vector<8x64xf32>
    %199 = math.exp %198 : vector<8x64xf32>
    %cst_42 = arith.constant 1.000000e+00 : f32
    %200 = vector.broadcast %cst_42 : f32 to vector<8x64xf32>
    %201 = arith.addf %200, %199 : vector<8x64xf32>
    %202 = arith.divf %200, %201 : vector<8x64xf32>
    %203 = arith.mulf %202, %176 : vector<8x64xf32>
    %204 = arith.mulf %188, %190 : vector<8x64xf32>
    %205 = arith.addf %203, %204 : vector<8x64xf32>
    %206 = math.tanh %205 : vector<8x64xf32>
    %207 = arith.mulf %196, %206 : vector<8x64xf32>
    %208 = arith.maximumf %179, %207 : vector<8x64xf32>
    %c56 = arith.constant 56 : index
    %c0_43 = arith.constant 0 : index
    %209 = vector.load %arg7[%c56, %c0_43] : memref<64x256xf32, #tpu.memory_space<vmem>>, vector<8x256xf32>
    %cst_44 = arith.constant dense<0.000000e+00> : vector<8x256xf32>
    %210 = tpu.matmul %207, %16, %cst_44 {dimension_numbers = #tpu.dot_dimension_numbers<[1], [0], [0], [1], [0, 0, 1, 1], [], []>} : vector<8x64xf32>, vector<64x256xf32>, vector<8x256xf32> -> vector<8x256xf32>
    %211 = arith.addf %210, %209 : vector<8x256xf32>
    %212 = vector.extract_strided_slice %211 {offsets = [0, 0], sizes = [8, 64], strides = [1, 1]} : vector<8x256xf32> to vector<8x64xf32>
    %213 = arith.negf %212 : vector<8x64xf32>
    %214 = math.exp %213 : vector<8x64xf32>
    %cst_45 = arith.constant 1.000000e+00 : f32
    %215 = vector.broadcast %cst_45 : f32 to vector<8x64xf32>
    %216 = arith.addf %215, %214 : vector<8x64xf32>
    %217 = arith.divf %215, %216 : vector<8x64xf32>
    %218 = vector.extract_strided_slice %211 {offsets = [0, 128], sizes = [8, 64], strides = [1, 1]} : vector<8x256xf32> to vector<8x64xf32>
    %219 = math.tanh %218 : vector<8x64xf32>
    %220 = vector.extract_strided_slice %211 {offsets = [0, 192], sizes = [8, 64], strides = [1, 1]} : vector<8x256xf32> to vector<8x64xf32>
    %221 = arith.negf %220 : vector<8x64xf32>
    %222 = math.exp %221 : vector<8x64xf32>
    %cst_46 = arith.constant 1.000000e+00 : f32
    %223 = vector.broadcast %cst_46 : f32 to vector<8x64xf32>
    %224 = arith.addf %223, %222 : vector<8x64xf32>
    %225 = arith.divf %223, %224 : vector<8x64xf32>
    %226 = vector.extract_strided_slice %211 {offsets = [0, 64], sizes = [8, 64], strides = [1, 1]} : vector<8x256xf32> to vector<8x64xf32>
    %227 = arith.negf %226 : vector<8x64xf32>
    %228 = math.exp %227 : vector<8x64xf32>
    %cst_47 = arith.constant 1.000000e+00 : f32
    %229 = vector.broadcast %cst_47 : f32 to vector<8x64xf32>
    %230 = arith.addf %229, %228 : vector<8x64xf32>
    %231 = arith.divf %229, %230 : vector<8x64xf32>
    %232 = arith.mulf %231, %205 : vector<8x64xf32>
    %233 = arith.mulf %217, %219 : vector<8x64xf32>
    %234 = arith.addf %232, %233 : vector<8x64xf32>
    %235 = math.tanh %234 : vector<8x64xf32>
    %236 = arith.mulf %225, %235 : vector<8x64xf32>
    %237 = arith.maximumf %208, %236 : vector<8x64xf32>
    %238 = math.tanh %237 : vector<8x64xf32>
    %c0_48 = arith.constant 0 : index
    %c0_49 = arith.constant 0 : index
    %239 = vector.load %arg4[%c0_48, %c0_49] : memref<64x4xf32, #tpu.memory_space<vmem>>, vector<64x4xf32>
    %cst_50 = arith.constant dense<0.000000e+00> : vector<8x4xf32>
    %240 = tpu.matmul %238, %239, %cst_50 {dimension_numbers = #tpu.dot_dimension_numbers<[1], [0], [0], [1], [0, 0, 1, 1], [], []>} : vector<8x64xf32>, vector<64x4xf32>, vector<8x4xf32> -> vector<8x4xf32>
    %c0_51 = arith.constant 0 : index
    %c0_52 = arith.constant 0 : index
    %241 = vector.load %arg5[%c0_51, %c0_52] : memref<1x4xf32, #tpu.memory_space<vmem>>, vector<1x4xf32>
    %242 = vector.broadcast %241 : vector<1x4xf32> to vector<8x4xf32>
    %243 = arith.addf %240, %242 : vector<8x4xf32>
    %cst_53 = arith.constant dense<0xFF800000> : vector<8xf32>
    %244 = vector.multi_reduction <maximumf>, %243, %cst_53 [1] : vector<8x4xf32> to vector<8xf32>
    %245 = vector.shape_cast %244 : vector<8xf32> to vector<8x1xf32>
    %246 = vector.broadcast %245 : vector<8x1xf32> to vector<8x4xf32>
    %247 = arith.subf %243, %246 : vector<8x4xf32>
    %248 = math.exp %247 : vector<8x4xf32>
    %cst_54 = arith.constant dense<0.000000e+00> : vector<8xf32>
    %249 = vector.multi_reduction <add>, %248, %cst_54 [1] : vector<8x4xf32> to vector<8xf32>
    %250 = vector.shape_cast %249 : vector<8xf32> to vector<8x1xf32>
    %251 = vector.broadcast %250 : vector<8x1xf32> to vector<8x4xf32>
    %252 = arith.divf %248, %251 : vector<8x4xf32>
    %253 = vector.extract_strided_slice %252 {offsets = [0, 0], sizes = [2, 4], strides = [1, 1]} : vector<8x4xf32> to vector<2x4xf32>
    %c0_55 = arith.constant 0 : index
    %c0_56 = arith.constant 0 : index
    %254 = vector.load %arg6[%c0_55, %c0_56] : memref<2x4xf32, #tpu.memory_space<vmem>>, vector<2x4xf32>
    tpu.vector_store %arg6[%c0_55, %c0_56], %253 {strides = array<i32>} : memref<2x4xf32, #tpu.memory_space<vmem>>, vector<2x4xf32>,
    return
  }
}

</mosaic_0001>

<llo_original>
// kernel: tpu_custom_call.1
$region0: #{tpu_custom_call.1}
  #allocation0 [shape = 'u32[]', space=smem, size = 0x4, offset = 0x4, fixed_abs, tag = 'smem constant byte address 0x4 - core index']
  #allocation1 [shape = 'u32[144,128]{1,0:T(1,128)}', space=vmem, size = 0x12000, scoped, tag = 'internal scratch']
  #allocation2 [shape = 'f32[64,256]{1,0:T(8,128)}', space=vmem, size = 0x10000, scoped, tag = 'scratch operand']
  %s0 = inlined_call_operand.vmem [shape: s32[64,1], index: 0, kind: input, shape index: {}]
  %s1 = inlined_call_operand.vmem [shape: s32[64,1], index: 1, kind: input, shape index: {}]
  %s2 = inlined_call_operand.hbm [shape: f32[128,256], index: 2, kind: input, shape index: {}]
  %s3 = inlined_call_operand.vmem [shape: f32[64,256], index: 3, kind: input, shape index: {}]
  %s4 = inlined_call_operand.vmem [shape: f32[64,4], index: 4, kind: input, shape index: {}]
  %s5 = inlined_call_operand.vmem [shape: f32[1,4], index: 5, kind: input, shape index: {}]
  %s6 = inlined_call_operand.hbm [shape: f32[2,4], index: 6, kind: output, shape index: {}]
  %s7 = sld [smem:[#allocation0]]
  $region38: #{tpu_custom_call.1} parent=0
    _
  %s9 = ssub.s32 1, %s7
  %s10 = scalar_select 0, %s9, %s7
  $region1: #{tpu_custom_call.1} parent=0
    #allocation3 [shape = 'u8[131072]{0}', space=vmem, size = 0x20000, scoped, tag = 'input window, operand 2, single buffered']
    #allocation4 [shape = 's32[1]{0}', space=sflag, size = 0x4, scoped, tag = 'scoped memory for tpu_custom_call.1']
    #allocation5 [shape = 's32[1]{0}', space=sflag, size = 0x4, scoped, tag = 'scoped memory for tpu_custom_call.1']
    #allocation6 [shape = 'u8[1024]{0}', space=vmem, size = 0x400, scoped, tag = 'output window, operand 0, single buffered']
    %11 = vsyncpa [#allocation4], 0
    %12 = vsyncpa [#allocation5], 0
    // Predicated region
    $region2: #{tpu_custom_call.1} parent=1 // pred_check
      _
    $region3: #{tpu_custom_call.1} parent=1 // pred_check_branch
      %14 = sbr.rel (0) target = $region5
    $region4: #{tpu_custom_call.1} parent=1 // pred_region
      _
    $region5: #{tpu_custom_call.1} parent=1 // pred_fallthru
      _
    // Predicated region
    $region6: #{tpu_custom_call.1} parent=1 // pred_check
      _
    $region7: #{tpu_custom_call.1} parent=1 // pred_check_branch
      %16 = sbr.rel (0) target = $region9
    $region8: #{tpu_custom_call.1} parent=1 // pred_region
      _
    $region9: #{tpu_custom_call.1} parent=1 // pred_fallthru
      _
    // Predicated region
    $region10: #{tpu_custom_call.1} parent=1 // pred_check
      _
    $region11: #{tpu_custom_call.1} parent=1 // pred_check_branch
      %18 = sbr.rel (0) target = $region13
    $region12: #{tpu_custom_call.1} parent=1 // pred_region
      %s20 = ssub.s32 4096, 4096
      %21 = vsyncadd [#allocation4], %s20
      %s22 = sshll.u32 [#allocation3], 4
      %s23 = int_to_ptr.vmem [resolvable:$true] %s22
      %28 = dma.hbm_to_vmem [thread:$0]  %s2, 4096, %s23, [#allocation4], 256, 256, 16
    $region13: #{tpu_custom_call.1} parent=1 // pred_fallthru
      _
    // Predicated region
    $region14: #{tpu_custom_call.1} parent=1 // pred_check
      _
    $region15: #{tpu_custom_call.1} parent=1 // pred_check_branch
      %30 = sbr.rel (0) target = $region17
    $region16: #{tpu_custom_call.1} parent=1 // pred_region
      _
    $region17: #{tpu_custom_call.1} parent=1 // pred_fallthru
      _
    // Predicated region
    $region18: #{tpu_custom_call.1} parent=1 // pred_check
      _
    $region19: #{tpu_custom_call.1} parent=1 // pred_check_branch
      %32 = sbr.rel (0) target = $region21
    $region20: #{tpu_custom_call.1} parent=1 // pred_region
      _
    $region21: #{tpu_custom_call.1} parent=1 // pred_fallthru
      _
    // Predicated region
    $region22: #{tpu_custom_call.1} parent=1 // pred_check
      _
    $region23: #{tpu_custom_call.1} parent=1 // pred_check_branch
      %34 = sbr.rel (0) target = $region25
    $region24: #{tpu_custom_call.1} parent=1 // pred_region
      _
    $region25: #{tpu_custom_call.1} parent=1 // pred_fallthru
      _
    // Predicated region
    $region26: #{tpu_custom_call.1} parent=1 // pred_check
      _
    $region27: #{tpu_custom_call.1} parent=1 // pred_check_branch
      %36 = sbr.rel (0) target = $region29
    $region28: #{tpu_custom_call.1} parent=1 // pred_region
      %37 = dma.done [#allocation4], 4096
    $region29: #{tpu_custom_call.1} parent=1 // pred_fallthru
      _
    %v38 = vlaneseq
    %v39 = vand.u32 %v38, 127
    %v40 = vld [vmem:[%s0] sm:$0xff]
    %v41 = vld [vmem:[%s0 + $0x8] sm:$0xff]
    %v42 = vld [vmem:[%s0 + $0x10] sm:$0xff]
    %v43 = vld [vmem:[%s0 + $0x18] sm:$0xff]
    %v44 = vld [vmem:[%s0 + $0x20] sm:$0xff]
    %v45 = vld [vmem:[%s0 + $0x28] sm:$0xff]
    %v46 = vld [vmem:[%s0 + $0x30] sm:$0xff]
    %v47 = vld [vmem:[%s0 + $0x38] sm:$0xff]
    %48 = vset.pattern.permute.xlu0 0
    %49 = vperm.xlu0 %48, %v40
    %v50 = vpop.permute.xlu0 %49
    %51 = vset.pattern.permute.xlu0 0
    %52 = vperm.xlu0 %51, %v41
    %v53 = vpop.permute.xlu0 %52
    %54 = vset.pattern.permute.xlu0 0
    %55 = vperm.xlu0 %54, %v42
    %v56 = vpop.permute.xlu0 %55
    %57 = vset.pattern.permute.xlu0 0
    %58 = vperm.xlu0 %57, %v43
    %v59 = vpop.permute.xlu0 %58
    %60 = vset.pattern.permute.xlu0 0
    %61 = vperm.xlu0 %60, %v44
    %v62 = vpop.permute.xlu0 %61
    %63 = vset.pattern.permute.xlu0 0
    %64 = vperm.xlu0 %63, %v45
    %v65 = vpop.permute.xlu0 %64
    %66 = vset.pattern.permute.xlu0 0
    %67 = vperm.xlu0 %66, %v46
    %v68 = vpop.permute.xlu0 %67
    %69 = vset.pattern.permute.xlu0 0
    %70 = vperm.xlu0 %69, %v47
    %v71 = vpop.permute.xlu0 %70
    %vm72 = vcmp.eq.s32.totalorder %v39, %v50
    %vm73 = vcmp.eq.s32.totalorder %v39, %v53
    %vm74 = vcmp.eq.s32.totalorder %v39, %v56
    %vm75 = vcmp.eq.s32.totalorder %v39, %v59
    %vm76 = vcmp.eq.s32.totalorder %v39, %v62
    %vm77 = vcmp.eq.s32.totalorder %v39, %v65
    %vm78 = vcmp.eq.s32.totalorder %v39, %v68
    %vm79 = vcmp.eq.s32.totalorder %v39, %v71
    %v80 = vld [vmem:[%s1] sm:$0xff]
    %v81 = vld [vmem:[%s1 + $0x8] sm:$0xff]
    %v82 = vld [vmem:[%s1 + $0x10] sm:$0xff]
    %v83 = vld [vmem:[%s1 + $0x18] sm:$0xff]
    %v84 = vld [vmem:[%s1 + $0x20] sm:$0xff]
    %v85 = vld [vmem:[%s1 + $0x28] sm:$0xff]
    %v86 = vld [vmem:[%s1 + $0x30] sm:$0xff]
    %v87 = vld [vmem:[%s1 + $0x38] sm:$0xff]
    %88 = vset.pattern.permute.xlu0 0
    %89 = vperm.xlu0 %88, %v80
    %v90 = vpop.permute.xlu0 %89
    %91 = vset.pattern.permute.xlu0 0
    %92 = vperm.xlu0 %91, %v81
    %v93 = vpop.permute.xlu0 %92
    %94 = vset.pattern.permute.xlu0 0
    %95 = vperm.xlu0 %94, %v82
    %v96 = vpop.permute.xlu0 %95
    %97 = vset.pattern.permute.xlu0 0
    %98 = vperm.xlu0 %97, %v83
    %v99 = vpop.permute.xlu0 %98
    %100 = vset.pattern.permute.xlu0 0
    %101 = vperm.xlu0 %100, %v84
    %v102 = vpop.permute.xlu0 %101
    %103 = vset.pattern.permute.xlu0 0
    %104 = vperm.xlu0 %103, %v85
    %v105 = vpop.permute.xlu0 %104
    %106 = vset.pattern.permute.xlu0 0
    %107 = vperm.xlu0 %106, %v86
    %v108 = vpop.permute.xlu0 %107
    %109 = vset.pattern.permute.xlu0 0
    %110 = vperm.xlu0 %109, %v87
    %v111 = vpop.permute.xlu0 %110
    %vm112 = vcmp.eq.s32.totalorder %v39, %v90
    %vm113 = vcmp.eq.s32.totalorder %v39, %v93
    %vm114 = vcmp.eq.s32.totalorder %v39, %v96
    %vm115 = vcmp.eq.s32.totalorder %v39, %v99
    %vm116 = vcmp.eq.s32.totalorder %v39, %v102
    %vm117 = vcmp.eq.s32.totalorder %v39, %v105
    %vm118 = vcmp.eq.s32.totalorder %v39, %v108
    %vm119 = vcmp.eq.s32.totalorder %v39, %v111
    %vm120 = vmor %vm72, %vm112
    %vm121 = vmor %vm73, %vm113
    %vm122 = vmor %vm74, %vm114
    %vm123 = vmor %vm75, %vm115
    %vm124 = vmor %vm76, %vm116
    %vm125 = vmor %vm77, %vm117
    %vm126 = vmor %vm78, %vm118
    %vm127 = vmor %vm79, %vm119
    %vm128 = vcmp.eq.s32.totalorder %v39, 100
    %vm129 = vmor %vm120, %vm128
    %vm130 = vmor %vm121, %vm128
    %vm131 = vmor %vm122, %vm128
    %vm132 = vmor %vm123, %vm128
    %vm133 = vmor %vm124, %vm128
    %vm134 = vmor %vm125, %vm128
    %vm135 = vmor %vm126, %vm128
    %vm136 = vmor %vm127, %vm128
    %v137 = vsel %vm129, 1, 0
    %v138 = vsel %vm130, 1, 0
    %v139 = vsel %vm131, 1, 0
    %v140 = vsel %vm132, 1, 0
    %v141 = vsel %vm133, 1, 0
    %v142 = vsel %vm134, 1, 0
    %v143 = vsel %vm135, 1, 0
    %v144 = vsel %vm136, 1, 0
    %v145 = vcvt.s32.f32 %v137
    %v146 = vcvt.s32.f32 %v138
    %v147 = vcvt.s32.f32 %v139
    %v148 = vcvt.s32.f32 %v140
    %v149 = vcvt.s32.f32 %v141
    %v150 = vcvt.s32.f32 %v142
    %v151 = vcvt.s32.f32 %v143
    %v152 = vcvt.s32.f32 %v144
    %v153 = vld [vmem:[#allocation3] sm:$0xff]
    %v154 = vld [vmem:[#allocation3 + $0x8] sm:$0xff]
    %v155 = vld [vmem:[#allocation3 + $0x10] sm:$0xff]
    %v156 = vld [vmem:[#allocation3 + $0x18] sm:$0xff]
    %v157 = vld [vmem:[#allocation3 + $0x20] sm:$0xff]
    %v158 = vld [vmem:[#allocation3 + $0x28] sm:$0xff]
    %v159 = vld [vmem:[#allocation3 + $0x30] sm:$0xff]
    %v160 = vld [vmem:[#allocation3 + $0x38] sm:$0xff]
    %v161 = vld [vmem:[#allocation3 + $0x40] sm:$0xff]
    %v162 = vld [vmem:[#allocation3 + $0x48] sm:$0xff]
    %v163 = vld [vmem:[#allocation3 + $0x50] sm:$0xff]
    %v164 = vld [vmem:[#allocation3 + $0x58] sm:$0xff]
    %v165 = vld [vmem:[#allocation3 + $0x60] sm:$0xff]
    %v166 = vld [vmem:[#allocation3 + $0x68] sm:$0xff]
    %v167 = vld [vmem:[#allocation3 + $0x70] sm:$0xff]
    %v168 = vld [vmem:[#allocation3 + $0x78] sm:$0xff]
    %v169 = vld [vmem:[#allocation3 + $0x80] sm:$0xff]
    %v170 = vld [vmem:[#allocation3 + $0x88] sm:$0xff]
    %v171 = vld [vmem:[#allocation3 + $0x90] sm:$0xff]
    %v172 = vld [vmem:[#allocation3 + $0x98] sm:$0xff]
    %v173 = vld [vmem:[#allocation3 + $0xa0] sm:$0xff]
    %v174 = vld [vmem:[#allocation3 + $0xa8] sm:$0xff]
    %v175 = vld [vmem:[#allocation3 + $0xb0] sm:$0xff]
    %v176 = vld [vmem:[#allocation3 + $0xb8] sm:$0xff]
    %v177 = vld [vmem:[#allocation3 + $0xc0] sm:$0xff]
    %v178 = vld [vmem:[#allocation3 + $0xc8] sm:$0xff]
    %v179 = vld [vmem:[#allocation3 + $0xd0] sm:$0xff]
    %v180 = vld [vmem:[#allocation3 + $0xd8] sm:$0xff]
    %v181 = vld [vmem:[#allocation3 + $0xe0] sm:$0xff]
    %v182 = vld [vmem:[#allocation3 + $0xe8] sm:$0xff]
    %v183 = vld [vmem:[#allocation3 + $0xf0] sm:$0xff]
    %v184 = vld [vmem:[#allocation3 + $0xf8] sm:$0xff]
    %185 = vmatprep.subr.mxu0 %v154
    %186 = vmatpush1.msra.mxu0 %v153
    %187 = vmatprep.subr.mxu0 %v156
    %188 = vmatpush1.msra.mxu0 %v155
    %189 = vmatprep.subr.mxu0 %v158
    %190 = vmatpush1.msra.mxu0 %v157
    %191 = vmatprep.subr.mxu0 %v160
    %192 = vmatpush1.msra.mxu0 %v159
    %193 = vmatprep.subr.mxu0 %v162
    %194 = vmatpush1.msra.mxu0 %v161
    %195 = vmatprep.subr.mxu0 %v164
    %196 = vmatpush1.msra.mxu0 %v163
    %197 = vmatprep.subr.mxu0 %v166
    %198 = vmatpush1.msra.mxu0 %v165
    %199 = vmatprep.subr.mxu0 %v168
    %200 = vmatpush1.msra.mxu0 %v167
    %201 = vmatprep.subr.mxu0 %v170
    %202 = vmatpush1.msra.mxu0 %v169
    %203 = vmatprep.subr.mxu0 %v172
    %204 = vmatpush1.msra.mxu0 %v171
    %205 = vmatprep.subr.mxu0 %v174
    %206 = vmatpush1.msra.mxu0 %v173
    %207 = vmatprep.subr.mxu0 %v176
    %208 = vmatpush1.msra.mxu0 %v175
    %209 = vmatprep.subr.mxu0 %v178
    %210 = vmatpush1.msra.mxu0 %v177
    %211 = vmatprep.subr.mxu0 %v180
    %212 = vmatpush1.msra.mxu0 %v179
    %213 = vmatprep.subr.mxu0 %v182
    %214 = vmatpush1.msra.mxu0 %v181
    %215 = vmatprep.subr.mxu0 %v184
    %216 = vmatpush1.msra.mxu0 %v183
    %217 = vmatprep.subr.mxu0 0.0
    %218 = vmatpush1.msra.mxu0 0.0
    %219 = vmatprep.subr.mxu0 0.0
    %220 = vmatpush1.msra.mxu0 0.0
    %221 = vmatprep.subr.mxu0 0.0
    %222 = vmatpush1.msra.mxu0 0.0
    %223 = vmatprep.subr.mxu0 0.0
    %224 = vmatpush1.msra.mxu0 0.0
    %225 = vmatprep.subr.mxu0 0.0
    %226 = vmatpush1.msra.mxu0 0.0
    %227 = vmatprep.subr.mxu0 0.0
    %228 = vmatpush1.msra.mxu0 0.0
    %229 = vmatprep.subr.mxu0 0.0
    %230 = vmatpush1.msra.mxu0 0.0
    %231 = vmatprep.subr.mxu0 0.0
    %232 = vmatpush1.msra.mxu0 0.0
    %233 = vmatprep.subr.mxu0 0.0
    %234 = vmatpush1.msra.mxu0 0.0
    %235 = vmatprep.subr.mxu0 0.0
    %236 = vmatpush1.msra.mxu0 0.0
    %237 = vmatprep.subr.mxu0 0.0
    %238 = vmatpush1.msra.mxu0 0.0
    %239 = vmatprep.subr.mxu0 0.0
    %240 = vmatpush1.msra.mxu0 0.0
    %241 = vmatprep.subr.mxu0 0.0
    %242 = vmatpush1.msra.mxu0 0.0
    %243 = vmatprep.subr.mxu0 0.0
    %244 = vmatpush1.msra.mxu0 0.0
    %245 = vmatprep.subr.mxu0 0.0
    %246 = vmatpush1.msra.mxu0 0.0
    %247 = vmatprep.subr.mxu0 0.0
    %248 = vmatpush1.msra.mxu0 0.0
    %249 = vmatprep.mubr.f32.mxu0 0.0
    %250 = vmatmul.mubr.f32.gmra.mrb[0].mxu0 %v145
    %v251 = vpop.f32.mrb[0].mxu0
    %v252 = vadd.f32 0.0, %v251
    %v253 = vpop.f32.mrb[0].mxu0
    %v254 = vadd.f32 0.0, %v253
    %255 = vmatprep.mubr.f32.mxu0 0.0
    %256 = vmatmul.mubr.f32.gmra.mrb[0].mxu0 %v146
    %v257 = vpop.f32.mrb[0].mxu0
    %v258 = vadd.f32 0.0, %v257
    %v259 = vpop.f32.mrb[0].mxu0
    %v260 = vadd.f32 0.0, %v259
    %261 = vmatprep.mubr.f32.mxu0 0.0
    %262 = vmatmul.mubr.f32.gmra.mrb[0].mxu0 %v147
    %v263 = vpop.f32.mrb[0].mxu0
    %v264 = vadd.f32 0.0, %v263
    %v265 = vpop.f32.mrb[0].mxu0
    %v266 = vadd.f32 0.0, %v265
    %267 = vmatprep.mubr.f32.mxu0 0.0
    %268 = vmatmul.mubr.f32.gmra.mrb[0].mxu0 %v148
    %v269 = vpop.f32.mrb[0].mxu0
    %v270 = vadd.f32 0.0, %v269
    %v271 = vpop.f32.mrb[0].mxu0
    %v272 = vadd.f32 0.0, %v271
    %273 = vmatprep.mubr.f32.mxu0 0.0
    %274 = vmatmul.mubr.f32.gmra.mrb[0].mxu0 %v149
    %v275 = vpop.f32.mrb[0].mxu0
    %v276 = vadd.f32 0.0, %v275
    %v277 = vpop.f32.mrb[0].mxu0
    %v278 = vadd.f32 0.0, %v277
    %279 = vmatprep.mubr.f32.mxu0 0.0
    %280 = vmatmul.mubr.f32.gmra.mrb[0].mxu0 %v150
    %v281 = vpop.f32.mrb[0].mxu0
    %v282 = vadd.f32 0.0, %v281
    %v283 = vpop.f32.mrb[0].mxu0
    %v284 = vadd.f32 0.0, %v283
    %285 = vmatprep.mubr.f32.mxu0 0.0
    %286 = vmatmul.mubr.f32.gmra.mrb[0].mxu0 %v151
    %v287 = vpop.f32.mrb[0].mxu0
    %v288 = vadd.f32 0.0, %v287
    %v289 = vpop.f32.mrb[0].mxu0
    %v290 = vadd.f32 0.0, %v289
    %291 = vmatprep.mubr.f32.mxu0 0.0
    %292 = vmatmul.mubr.f32.gmra.mrb[0].mxu0 %v152
    %v293 = vpop.f32.mrb[0].mxu0
    %v294 = vadd.f32 0.0, %v293
    %v295 = vpop.f32.mrb[0].mxu0
    %v296 = vadd.f32 0.0, %v295
    %297 = vdwg.mxu0
    %298 = vst [vmem:[#allocation2] sm:$0xff] %v252
    %299 = vst [vmem:[#allocation2 + $0x8] sm:$0xff] %v254
    %300 = vst [vmem:[#allocation2 + $0x10] sm:$0xff] %v258
    %301 = vst [vmem:[#allocation2 + $0x18] sm:$0xff] %v260
    %302 = vst [vmem:[#allocation2 + $0x20] sm:$0xff] %v264
    %303 = vst [vmem:[#allocation2 + $0x28] sm:$0xff] %v266
    %304 = vst [vmem:[#allocation2 + $0x30] sm:$0xff] %v270
    %305 = vst [vmem:[#allocation2 + $0x38] sm:$0xff] %v272
    %306 = vst [vmem:[#allocation2 + $0x40] sm:$0xff] %v276
    %307 = vst [vmem:[#allocation2 + $0x48] sm:$0xff] %v278
    %308 = vst [vmem:[#allocation2 + $0x50] sm:$0xff] %v282
    %309 = vst [vmem:[#allocation2 + $0x58] sm:$0xff] %v284
    %310 = vst [vmem:[#allocation2 + $0x60] sm:$0xff] %v288
    %311 = vst [vmem:[#allocation2 + $0x68] sm:$0xff] %v290
    %312 = vst [vmem:[#allocation2 + $0x70] sm:$0xff] %v294
    %313 = vst [vmem:[#allocation2 + $0x78] sm:$0xff] %v296
    %v314 = vld [vmem:[%s3] sm:$0xff]
    %v315 = vld [vmem:[%s3 + $0x8] sm:$0xff]
    %v316 = vld [vmem:[%s3 + $0x10] sm:$0xff]
    %v317 = vld [vmem:[%s3 + $0x18] sm:$0xff]
    %v318 = vld [vmem:[%s3 + $0x20] sm:$0xff]
    %v319 = vld [vmem:[%s3 + $0x28] sm:$0xff]
    %v320 = vld [vmem:[%s3 + $0x30] sm:$0xff]
    %v321 = vld [vmem:[%s3 + $0x38] sm:$0xff]
    %v322 = vld [vmem:[%s3 + $0x40] sm:$0xff]
    %v323 = vld [vmem:[%s3 + $0x48] sm:$0xff]
    %v324 = vld [vmem:[%s3 + $0x50] sm:$0xff]
    %v325 = vld [vmem:[%s3 + $0x58] sm:$0xff]
    %v326 = vld [vmem:[%s3 + $0x60] sm:$0xff]
    %v327 = vld [vmem:[%s3 + $0x68] sm:$0xff]
    %v328 = vld [vmem:[%s3 + $0x70] sm:$0xff]
    %v329 = vld [vmem:[%s3 + $0x78] sm:$0xff]
    %v330 = vld [vmem:[#allocation2] sm:$0xff]
    %v331 = vld [vmem:[#allocation2 + $0x8] sm:$0xff]
    %v332 = vxor.u32 %v330, 2147483648
    %v333 = vmul.f32 %v332, 1.442695
    %v334 = vpow.pop %v333
    %v335 = vadd.f32 %v334, 1.0
    %v336 = vrcp.pop %v335
    %v337 = vmul.f32 1.0, %v336
    %v338 = vtanh.pop %v331
    %v339 = vxor.u32 %v331, 2147483648
    %v340 = vmul.f32 %v339, 1.442695
    %v341 = vpow.pop %v340
    %v342 = vadd.f32 %v341, 1.0
    %v343 = vrcp.pop %v342
    %v344 = vmul.f32 1.0, %v343
    %v345 = vmul.f32 %v337, %v338
    %v346 = vtanh.pop %v345
    %348 = vrot.lane.b32.xlu0 %v346, 64
    %v349 = vpop.permute.xlu0 %348
    %v351 = vmul.f32 %v344, %v349
    %v352 = vld [vmem:[#allocation2 + $0x10] sm:$0xff]
    %v353 = vld [vmem:[#allocation2 + $0x18] sm:$0xff]
    %355 = vrot.lane.b32.xlu0 %v351, 64
    %v356 = vpop.permute.xlu0 %355
    %vm357 = vcmask 523264
    %v358 = vsel %vm357, %v356, 0
    %360 = vmatprep.subr.mxu0 %v315
    %361 = vmatpush1.msra.mxu0 %v314
    %362 = vmatprep.subr.mxu0 %v317
    %363 = vmatpush1.msra.mxu0 %v316
    %364 = vmatprep.subr.mxu0 %v319
    %365 = vmatpush1.msra.mxu0 %v318
    %366 = vmatprep.subr.mxu0 %v321
    %367 = vmatpush1.msra.mxu0 %v320
    %368 = vmatprep.subr.mxu0 %v323
    %369 = vmatpush1.msra.mxu0 %v322
    %370 = vmatprep.subr.mxu0 %v325
    %371 = vmatpush1.msra.mxu0 %v324
    %372 = vmatprep.subr.mxu0 %v327
    %373 = vmatpush1.msra.mxu0 %v326
    %374 = vmatprep.subr.mxu0 %v329
    %375 = vmatpush1.msra.mxu0 %v328
    %376 = vmatprep.subr.mxu0 0.0
    %377 = vmatpush1.msra.mxu0 0.0
    %378 = vmatprep.subr.mxu0 0.0
    %379 = vmatpush1.msra.mxu0 0.0
    %380 = vmatprep.subr.mxu0 0.0
    %381 = vmatpush1.msra.mxu0 0.0
    %382 = vmatprep.subr.mxu0 0.0
    %383 = vmatpush1.msra.mxu0 0.0
    %384 = vmatprep.subr.mxu0 0.0
    %385 = vmatpush1.msra.mxu0 0.0
    %386 = vmatprep.subr.mxu0 0.0
    %387 = vmatpush1.msra.mxu0 0.0
    %388 = vmatprep.subr.mxu0 0.0
    %389 = vmatpush1.msra.mxu0 0.0
    %390 = vmatprep.subr.mxu0 0.0
    %391 = vmatpush1.msra.mxu0 0.0
    %392 = vmatprep.subr.mxu0 0.0
    %393 = vmatpush1.msra.mxu0 0.0
    %394 = vmatprep.subr.mxu0 0.0
    %395 = vmatpush1.msra.mxu0 0.0
    %396 = vmatprep.subr.mxu0 0.0
    %397 = vmatpush1.msra.mxu0 0.0
    %398 = vmatprep.subr.mxu0 0.0
    %399 = vmatpush1.msra.mxu0 0.0
    %400 = vmatprep.subr.mxu0 0.0
    %401 = vmatpush1.msra.mxu0 0.0
    %402 = vmatprep.subr.mxu0 0.0
    %403 = vmatpush1.msra.mxu0 0.0
    %404 = vmatprep.subr.mxu0 0.0
    %405 = vmatpush1.msra.mxu0 0.0
    %406 = vmatprep.subr.mxu0 0.0
    %407 = vmatpush1.msra.mxu0 0.0
    %408 = vmatprep.subr.mxu0 0.0
    %409 = vmatpush1.msra.mxu0 0.0
    %410 = vmatprep.subr.mxu0 0.0
    %411 = vmatpush1.msra.mxu0 0.0
    %412 = vmatprep.subr.mxu0 0.0
    %413 = vmatpush1.msra.mxu0 0.0
    %414 = vmatprep.subr.mxu0 0.0
    %415 = vmatpush1.msra.mxu0 0.0
    %416 = vmatprep.subr.mxu0 0.0
    %417 = vmatpush1.msra.mxu0 0.0
    %418 = vmatprep.subr.mxu0 0.0
    %419 = vmatpush1.msra.mxu0 0.0
    %420 = vmatprep.subr.mxu0 0.0
    %421 = vmatpush1.msra.mxu0 0.0
    %422 = vmatprep.subr.mxu0 0.0
    %423 = vmatpush1.msra.mxu0 0.0
    %424 = vmatprep.mubr.f32.mxu0 0.0
    %425 = vmatmul.mubr.f32.gmra.mrb[0].mxu0 %v358
    %v426 = vpop.f32.mrb[0].mxu0
    %v427 = vadd.f32 %v352, %v426
    %v428 = vpop.f32.mrb[0].mxu0
    %v429 = vadd.f32 %v353, %v428
    %430 = vdwg.mxu0
    %v431 = vxor.u32 %v427, 2147483648
    %v432 = vmul.f32 %v431, 1.442695
    %v433 = vpow.pop %v432
    %v434 = vadd.f32 %v433, 1.0
    %v435 = vrcp.pop %v434
    %v436 = vmul.f32 1.0, %v435
    %v437 = vtanh.pop %v429
    %v438 = vxor.u32 %v429, 2147483648
    %v439 = vmul.f32 %v438, 1.442695
    %v440 = vpow.pop %v439
    %v441 = vadd.f32 %v440, 1.0
    %v442 = vrcp.pop %v441
    %v443 = vmul.f32 1.0, %v442
    %445 = vrot.lane.b32.xlu0 %v345, 64
    %v446 = vpop.permute.xlu0 %445
    %v448 = vmul.f32 %v436, %v446
    %v449 = vmul.f32 %v436, %v437
    %451 = vrot.lane.b32.xlu0 %v449, 64
    %v452 = vpop.permute.xlu0 %451
    %v454 = vadd.f32 %v448, %v452
    %v455 = vtanh.pop %v454
    %v456 = vmul.f32 %v443, %v455
    %v457 = vmax.f32 %v351, %v456
    %v458 = vld [vmem:[#allocation2 + $0x20] sm:$0xff]
    %v459 = vld [vmem:[#allocation2 + $0x28] sm:$0xff]
    %461 = vrot.lane.b32.xlu0 %v456, 64
    %v462 = vpop.permute.xlu0 %461
    %v463 = vsel %vm357, %v462, 0
    %465 = vmatprep.subr.mxu0 %v315
    %466 = vmatpush1.msra.mxu0 %v314
    %467 = vmatprep.subr.mxu0 %v317
    %468 = vmatpush1.msra.mxu0 %v316
    %469 = vmatprep.subr.mxu0 %v319
    %470 = vmatpush1.msra.mxu0 %v318
    %471 = vmatprep.subr.mxu0 %v321
    %472 = vmatpush1.msra.mxu0 %v320
    %473 = vmatprep.subr.mxu0 %v323
    %474 = vmatpush1.msra.mxu0 %v322
    %475 = vmatprep.subr.mxu0 %v325
    %476 = vmatpush1.msra.mxu0 %v324
    %477 = vmatprep.subr.mxu0 %v327
    %478 = vmatpush1.msra.mxu0 %v326
    %479 = vmatprep.subr.mxu0 %v329
    %480 = vmatpush1.msra.mxu0 %v328
    %481 = vmatprep.subr.mxu0 0.0
    %482 = vmatpush1.msra.mxu0 0.0
    %483 = vmatprep.subr.mxu0 0.0
    %484 = vmatpush1.msra.mxu0 0.0
    %485 = vmatprep.subr.mxu0 0.0
    %486 = vmatpush1.msra.mxu0 0.0
    %487 = vmatprep.subr.mxu0 0.0
    %488 = vmatpush1.msra.mxu0 0.0
    %489 = vmatprep.subr.mxu0 0.0
    %490 = vmatpush1.msra.mxu0 0.0
    %491 = vmatprep.subr.mxu0 0.0
    %492 = vmatpush1.msra.mxu0 0.0
    %493 = vmatprep.subr.mxu0 0.0
    %494 = vmatpush1.msra.mxu0 0.0
    %495 = vmatprep.subr.mxu0 0.0
    %496 = vmatpush1.msra.mxu0 0.0
    %497 = vmatprep.subr.mxu0 0.0
    %498 = vmatpush1.msra.mxu0 0.0
    %499 = vmatprep.subr.mxu0 0.0
    %500 = vmatpush1.msra.mxu0 0.0
    %501 = vmatprep.subr.mxu0 0.0
    %502 = vmatpush1.msra.mxu0 0.0
    %503 = vmatprep.subr.mxu0 0.0
    %504 = vmatpush1.msra.mxu0 0.0
    %505 = vmatprep.subr.mxu0 0.0
    %506 = vmatpush1.msra.mxu0 0.0
    %507 = vmatprep.subr.mxu0 0.0
    %508 = vmatpush1.msra.mxu0 0.0
    %509 = vmatprep.subr.mxu0 0.0
    %510 = vmatpush1.msra.mxu0 0.0
    %511 = vmatprep.subr.mxu0 0.0
    %512 = vmatpush1.msra.mxu0 0.0
    %513 = vmatprep.subr.mxu0 0.0
    %514 = vmatpush1.msra.mxu0 0.0
    %515 = vmatprep.subr.mxu0 0.0
    %516 = vmatpush1.msra.mxu0 0.0
    %517 = vmatprep.subr.mxu0 0.0
    %518 = vmatpush1.msra.mxu0 0.0
    %519 = vmatprep.subr.mxu0 0.0
    %520 = vmatpush1.msra.mxu0 0.0
    %521 = vmatprep.subr.mxu0 0.0
    %522 = vmatpush1.msra.mxu0 0.0
    %523 = vmatprep.subr.mxu0 0.0
    %524 = vmatpush1.msra.mxu0 0.0
    %525 = vmatprep.subr.mxu0 0.0
    %526 = vmatpush1.msra.mxu0 0.0
    %527 = vmatprep.subr.mxu0 0.0
    %528 = vmatpush1.msra.mxu0 0.0
    %529 = vmatprep.mubr.f32.mxu0 0.0
    %530 = vmatmul.mubr.f32.gmra.mrb[0].mxu0 %v463
    %v531 = vpop.f32.mrb[0].mxu0
    %v532 = vadd.f32 %v458, %v531
    %v533 = vpop.f32.mrb[0].mxu0
    %v534 = vadd.f32 %v459, %v533
    %535 = vdwg.mxu0
    %v536 = vxor.u32 %v532, 2147483648
    %v537 = vmul.f32 %v536, 1.442695
    %v538 = vpow.pop %v537
    %v539 = vadd.f32 %v538, 1.0
    %v540 = vrcp.pop %v539
    %v541 = vmul.f32 1.0, %v540
    %v542 = vtanh.pop %v534
    %v543 = vxor.u32 %v534, 2147483648
    %v544 = vmul.f32 %v543, 1.442695
    %v545 = vpow.pop %v544
    %v546 = vadd.f32 %v545, 1.0
    %v547 = vrcp.pop %v546
    %v548 = vmul.f32 1.0, %v547
    %v549 = vmul.f32 %v541, %v454
    %v550 = vmul.f32 %v541, %v542
    %552 = vrot.lane.b32.xlu0 %v550, 64
    %v553 = vpop.permute.xlu0 %552
    %v555 = vadd.f32 %v549, %v553
    %v556 = vtanh.pop %v555
    %v557 = vmul.f32 %v548, %v556
    %v558 = vmax.f32 %v457, %v557
    %v559 = vld [vmem:[#allocation2 + $0x30] sm:$0xff]
    %v560 = vld [vmem:[#allocation2 + $0x38] sm:$0xff]
    %562 = vrot.lane.b32.xlu0 %v557, 64
    %v563 = vpop.permute.xlu0 %562
    %v564 = vsel %vm357, %v563, 0
    %566 = vmatprep.subr.mxu0 %v315
    %567 = vmatpush1.msra.mxu0 %v314
    %568 = vmatprep.subr.mxu0 %v317
    %569 = vmatpush1.msra.mxu0 %v316
    %570 = vmatprep.subr.mxu0 %v319
    %571 = vmatpush1.msra.mxu0 %v318
    %572 = vmatprep.subr.mxu0 %v321
    %573 = vmatpush1.msra.mxu0 %v320
    %574 = vmatprep.subr.mxu0 %v323
    %575 = vmatpush1.msra.mxu0 %v322
    %576 = vmatprep.subr.mxu0 %v325
    %577 = vmatpush1.msra.mxu0 %v324
    %578 = vmatprep.subr.mxu0 %v327
    %579 = vmatpush1.msra.mxu0 %v326
    %580 = vmatprep.subr.mxu0 %v329
    %581 = vmatpush1.msra.mxu0 %v328
    %582 = vmatprep.subr.mxu0 0.0
    %583 = vmatpush1.msra.mxu0 0.0
    %584 = vmatprep.subr.mxu0 0.0
    %585 = vmatpush1.msra.mxu0 0.0
    %586 = vmatprep.subr.mxu0 0.0
    %587 = vmatpush1.msra.mxu0 0.0
    %588 = vmatprep.subr.mxu0 0.0
    %589 = vmatpush1.msra.mxu0 0.0
    %590 = vmatprep.subr.mxu0 0.0
    %591 = vmatpush1.msra.mxu0 0.0
    %592 = vmatprep.subr.mxu0 0.0
    %593 = vmatpush1.msra.mxu0 0.0
    %594 = vmatprep.subr.mxu0 0.0
    %595 = vmatpush1.msra.mxu0 0.0
    %596 = vmatprep.subr.mxu0 0.0
    %597 = vmatpush1.msra.mxu0 0.0
    %598 = vmatprep.subr.mxu0 0.0
    %599 = vmatpush1.msra.mxu0 0.0
    %600 = vmatprep.subr.mxu0 0.0
    %601 = vmatpush1.msra.mxu0 0.0
    %602 = vmatprep.subr.mxu0 0.0
    %603 = vmatpush1.msra.mxu0 0.0
    %604 = vmatprep.subr.mxu0 0.0
    %605 = vmatpush1.msra.mxu0 0.0
    %606 = vmatprep.subr.mxu0 0.0
    %607 = vmatpush1.msra.mxu0 0.0
    %608 = vmatprep.subr.mxu0 0.0
    %609 = vmatpush1.msra.mxu0 0.0
    %610 = vmatprep.subr.mxu0 0.0
    %611 = vmatpush1.msra.mxu0 0.0
    %612 = vmatprep.subr.mxu0 0.0
    %613 = vmatpush1.msra.mxu0 0.0
    %614 = vmatprep.subr.mxu0 0.0
    %615 = vmatpush1.msra.mxu0 0.0
    %616 = vmatprep.subr.mxu0 0.0
    %617 = vmatpush1.msra.mxu0 0.0
    %618 = vmatprep.subr.mxu0 0.0
    %619 = vmatpush1.msra.mxu0 0.0
    %620 = vmatprep.subr.mxu0 0.0
    %621 = vmatpush1.msra.mxu0 0.0
    %622 = vmatprep.subr.mxu0 0.0
    %623 = vmatpush1.msra.mxu0 0.0
    %624 = vmatprep.subr.mxu0 0.0
    %625 = vmatpush1.msra.mxu0 0.0
    %626 = vmatprep.subr.mxu0 0.0
    %627 = vmatpush1.msra.mxu0 0.0
    %628 = vmatprep.subr.mxu0 0.0
    %629 = vmatpush1.msra.mxu0 0.0
    %630 = vmatprep.mubr.f32.mxu0 0.0
    %631 = vmatmul.mubr.f32.gmra.mrb[0].mxu0 %v564
    %v632 = vpop.f32.mrb[0].mxu0
    %v633 = vadd.f32 %v559, %v632
    %v634 = vpop.f32.mrb[0].mxu0
    %v635 = vadd.f32 %v560, %v634
    %636 = vdwg.mxu0
    %v637 = vxor.u32 %v633, 2147483648
    %v638 = vmul.f32 %v637, 1.442695
    %v639 = vpow.pop %v638
    %v640 = vadd.f32 %v639, 1.0
    %v641 = vrcp.pop %v640
    %v642 = vmul.f32 1.0, %v641
    %v643 = vtanh.pop %v635
    %v644 = vxor.u32 %v635, 2147483648
    %v645 = vmul.f32 %v644, 1.442695
    %v646 = vpow.pop %v645
    %v647 = vadd.f32 %v646, 1.0
    %v648 = vrcp.pop %v647
    %v649 = vmul.f32 1.0, %v648
    %v650 = vmul.f32 %v642, %v555
    %v651 = vmul.f32 %v642, %v643
    %653 = vrot.lane.b32.xlu0 %v651, 64
    %v654 = vpop.permute.xlu0 %653
    %v656 = vadd.f32 %v650, %v654
    %v657 = vtanh.pop %v656
    %v658 = vmul.f32 %v649, %v657
    %v659 = vmax.f32 %v558, %v658
    %v660 = vld [vmem:[#allocation2 + $0x40] sm:$0xff]
    %v661 = vld [vmem:[#allocation2 + $0x48] sm:$0xff]
    %663 = vrot.lane.b32.xlu0 %v658, 64
    %v664 = vpop.permute.xlu0 %663
    %v665 = vsel %vm357, %v664, 0
    %667 = vmatprep.subr.mxu0 %v315
    %668 = vmatpush1.msra.mxu0 %v314
    %669 = vmatprep.subr.mxu0 %v317
    %670 = vmatpush1.msra.mxu0 %v316
    %671 = vmatprep.subr.mxu0 %v319
    %672 = vmatpush1.msra.mxu0 %v318
    %673 = vmatprep.subr.mxu0 %v321
    %674 = vmatpush1.msra.mxu0 %v320
    %675 = vmatprep.subr.mxu0 %v323
    %676 = vmatpush1.msra.mxu0 %v322
    %677 = vmatprep.subr.mxu0 %v325
    %678 = vmatpush1.msra.mxu0 %v324
    %679 = vmatprep.subr.mxu0 %v327
    %680 = vmatpush1.msra.mxu0 %v326
    %681 = vmatprep.subr.mxu0 %v329
    %682 = vmatpush1.msra.mxu0 %v328
    %683 = vmatprep.subr.mxu0 0.0
    %684 = vmatpush1.msra.mxu0 0.0
    %685 = vmatprep.subr.mxu0 0.0
    %686 = vmatpush1.msra.mxu0 0.0
    %687 = vmatprep.subr.mxu0 0.0
    %688 = vmatpush1.msra.mxu0 0.0
    %689 = vmatprep.subr.mxu0 0.0
    %690 = vmatpush1.msra.mxu0 0.0
    %691 = vmatprep.subr.mxu0 0.0
    %692 = vmatpush1.msra.mxu0 0.0
    %693 = vmatprep.subr.mxu0 0.0
    %694 = vmatpush1.msra.mxu0 0.0
    %695 = vmatprep.subr.mxu0 0.0
    %696 = vmatpush1.msra.mxu0 0.0
    %697 = vmatprep.subr.mxu0 0.0
    %698 = vmatpush1.msra.mxu0 0.0
    %699 = vmatprep.subr.mxu0 0.0
    %700 = vmatpush1.msra.mxu0 0.0
    %701 = vmatprep.subr.mxu0 0.0
    %702 = vmatpush1.msra.mxu0 0.0
    %703 = vmatprep.subr.mxu0 0.0
    %704 = vmatpush1.msra.mxu0 0.0
    %705 = vmatprep.subr.mxu0 0.0
    %706 = vmatpush1.msra.mxu0 0.0
    %707 = vmatprep.subr.mxu0 0.0
    %708 = vmatpush1.msra.mxu0 0.0
    %709 = vmatprep.subr.mxu0 0.0
    %710 = vmatpush1.msra.mxu0 0.0
    %711 = vmatprep.subr.mxu0 0.0
    %712 = vmatpush1.msra.mxu0 0.0
    %713 = vmatprep.subr.mxu0 0.0
    %714 = vmatpush1.msra.mxu0 0.0
    %715 = vmatprep.subr.mxu0 0.0
    %716 = vmatpush1.msra.mxu0 0.0
    %717 = vmatprep.subr.mxu0 0.0
    %718 = vmatpush1.msra.mxu0 0.0
    %719 = vmatprep.subr.mxu0 0.0
    %720 = vmatpush1.msra.mxu0 0.0
    %721 = vmatprep.subr.mxu0 0.0
    %722 = vmatpush1.msra.mxu0 0.0
    %723 = vmatprep.subr.mxu0 0.0
    %724 = vmatpush1.msra.mxu0 0.0
    %725 = vmatprep.subr.mxu0 0.0
    %726 = vmatpush1.msra.mxu0 0.0
    %727 = vmatprep.subr.mxu0 0.0
    %728 = vmatpush1.msra.mxu0 0.0
    %729 = vmatprep.subr.mxu0 0.0
    %730 = vmatpush1.msra.mxu0 0.0
    %731 = vmatprep.mubr.f32.mxu0 0.0
    %732 = vmatmul.mubr.f32.gmra.mrb[0].mxu0 %v665
    %v733 = vpop.f32.mrb[0].mxu0
    %v734 = vadd.f32 %v660, %v733
    %v735 = vpop.f32.mrb[0].mxu0
    %v736 = vadd.f32 %v661, %v735
    %737 = vdwg.mxu0
    %v738 = vxor.u32 %v734, 2147483648
    %v739 = vmul.f32 %v738, 1.442695
    %v740 = vpow.pop %v739
    %v741 = vadd.f32 %v740, 1.0
    %v742 = vrcp.pop %v741
    %v743 = vmul.f32 1.0, %v742
    %v744 = vtanh.pop %v736
    %v745 = vxor.u32 %v736, 2147483648
    %v746 = vmul.f32 %v745, 1.442695
    %v747 = vpow.pop %v746
    %v748 = vadd.f32 %v747, 1.0
    %v749 = vrcp.pop %v748
    %v750 = vmul.f32 1.0, %v749
    %v751 = vmul.f32 %v743, %v656
    %v752 = vmul.f32 %v743, %v744
    %754 = vrot.lane.b32.xlu0 %v752, 64
    %v755 = vpop.permute.xlu0 %754
    %v757 = vadd.f32 %v751, %v755
    %v758 = vtanh.pop %v757
    %v759 = vmul.f32 %v750, %v758
    %v760 = vmax.f32 %v659, %v759
    %v761 = vld [vmem:[#allocation2 + $0x50] sm:$0xff]
    %v762 = vld [vmem:[#allocation2 + $0x58] sm:$0xff]
    %764 = vrot.lane.b32.xlu0 %v759, 64
    %v765 = vpop.permute.xlu0 %764
    %v766 = vsel %vm357, %v765, 0
    %768 = vmatprep.subr.mxu0 %v315
    %769 = vmatpush1.msra.mxu0 %v314
    %770 = vmatprep.subr.mxu0 %v317
    %771 = vmatpush1.msra.mxu0 %v316
    %772 = vmatprep.subr.mxu0 %v319
    %773 = vmatpush1.msra.mxu0 %v318
    %774 = vmatprep.subr.mxu0 %v321
    %775 = vmatpush1.msra.mxu0 %v320
    %776 = vmatprep.subr.mxu0 %v323
    %777 = vmatpush1.msra.mxu0 %v322
    %778 = vmatprep.subr.mxu0 %v325
    %779 = vmatpush1.msra.mxu0 %v324
    %780 = vmatprep.subr.mxu0 %v327
    %781 = vmatpush1.msra.mxu0 %v326
    %782 = vmatprep.subr.mxu0 %v329
    %783 = vmatpush1.msra.mxu0 %v328
    %784 = vmatprep.subr.mxu0 0.0
    %785 = vmatpush1.msra.mxu0 0.0
    %786 = vmatprep.subr.mxu0 0.0
    %787 = vmatpush1.msra.mxu0 0.0
    %788 = vmatprep.subr.mxu0 0.0
    %789 = vmatpush1.msra.mxu0 0.0
    %790 = vmatprep.subr.mxu0 0.0
    %791 = vmatpush1.msra.mxu0 0.0
    %792 = vmatprep.subr.mxu0 0.0
    %793 = vmatpush1.msra.mxu0 0.0
    %794 = vmatprep.subr.mxu0 0.0
    %795 = vmatpush1.msra.mxu0 0.0
    %796 = vmatprep.subr.mxu0 0.0
    %797 = vmatpush1.msra.mxu0 0.0
    %798 = vmatprep.subr.mxu0 0.0
    %799 = vmatpush1.msra.mxu0 0.0
    %800 = vmatprep.subr.mxu0 0.0
    %801 = vmatpush1.msra.mxu0 0.0
    %802 = vmatprep.subr.mxu0 0.0
    %803 = vmatpush1.msra.mxu0 0.0
    %804 = vmatprep.subr.mxu0 0.0
    %805 = vmatpush1.msra.mxu0 0.0
    %806 = vmatprep.subr.mxu0 0.0
    %807 = vmatpush1.msra.mxu0 0.0
    %808 = vmatprep.subr.mxu0 0.0
    %809 = vmatpush1.msra.mxu0 0.0
    %810 = vmatprep.subr.mxu0 0.0
    %811 = vmatpush1.msra.mxu0 0.0
    %812 = vmatprep.subr.mxu0 0.0
    %813 = vmatpush1.msra.mxu0 0.0
    %814 = vmatprep.subr.mxu0 0.0
    %815 = vmatpush1.msra.mxu0 0.0
    %816 = vmatprep.subr.mxu0 0.0
    %817 = vmatpush1.msra.mxu0 0.0
    %818 = vmatprep.subr.mxu0 0.0
    %819 = vmatpush1.msra.mxu0 0.0
    %820 = vmatprep.subr.mxu0 0.0
    %821 = vmatpush1.msra.mxu0 0.0
    %822 = vmatprep.subr.mxu0 0.0
    %823 = vmatpush1.msra.mxu0 0.0
    %824 = vmatprep.subr.mxu0 0.0
    %825 = vmatpush1.msra.mxu0 0.0
    %826 = vmatprep.subr.mxu0 0.0
    %827 = vmatpush1.msra.mxu0 0.0
    %828 = vmatprep.subr.mxu0 0.0
    %829 = vmatpush1.msra.mxu0 0.0
    %830 = vmatprep.subr.mxu0 0.0
    %831 = vmatpush1.msra.mxu0 0.0
    %832 = vmatprep.mubr.f32.mxu0 0.0
    %833 = vmatmul.mubr.f32.gmra.mrb[0].mxu0 %v766
    %v834 = vpop.f32.mrb[0].mxu0
    %v835 = vadd.f32 %v761, %v834
    %v836 = vpop.f32.mrb[0].mxu0
    %v837 = vadd.f32 %v762, %v836
    %838 = vdwg.mxu0
    %v839 = vxor.u32 %v835, 2147483648
    %v840 = vmul.f32 %v839, 1.442695
    %v841 = vpow.pop %v840
    %v842 = vadd.f32 %v841, 1.0
    %v843 = vrcp.pop %v842
    %v844 = vmul.f32 1.0, %v843
    %v845 = vtanh.pop %v837
    %v846 = vxor.u32 %v837, 2147483648
    %v847 = vmul.f32 %v846, 1.442695
    %v848 = vpow.pop %v847
    %v849 = vadd.f32 %v848, 1.0
    %v850 = vrcp.pop %v849
    %v851 = vmul.f32 1.0, %v850
    %v852 = vmul.f32 %v844, %v757
    %v853 = vmul.f32 %v844, %v845
    %855 = vrot.lane.b32.xlu0 %v853, 64
    %v856 = vpop.permute.xlu0 %855
    %v858 = vadd.f32 %v852, %v856
    %v859 = vtanh.pop %v858
    %v860 = vmul.f32 %v851, %v859
    %v861 = vmax.f32 %v760, %v860
    %v862 = vld [vmem:[#allocation2 + $0x60] sm:$0xff]
    %v863 = vld [vmem:[#allocation2 + $0x68] sm:$0xff]
    %865 = vrot.lane.b32.xlu0 %v860, 64
    %v866 = vpop.permute.xlu0 %865
    %v867 = vsel %vm357, %v866, 0
    %869 = vmatprep.subr.mxu0 %v315
    %870 = vmatpush1.msra.mxu0 %v314
    %871 = vmatprep.subr.mxu0 %v317
    %872 = vmatpush1.msra.mxu0 %v316
    %873 = vmatprep.subr.mxu0 %v319
    %874 = vmatpush1.msra.mxu0 %v318
    %875 = vmatprep.subr.mxu0 %v321
    %876 = vmatpush1.msra.mxu0 %v320
    %877 = vmatprep.subr.mxu0 %v323
    %878 = vmatpush1.msra.mxu0 %v322
    %879 = vmatprep.subr.mxu0 %v325
    %880 = vmatpush1.msra.mxu0 %v324
    %881 = vmatprep.subr.mxu0 %v327
    %882 = vmatpush1.msra.mxu0 %v326
    %883 = vmatprep.subr.mxu0 %v329
    %884 = vmatpush1.msra.mxu0 %v328
    %885 = vmatprep.subr.mxu0 0.0
    %886 = vmatpush1.msra.mxu0 0.0
    %887 = vmatprep.subr.mxu0 0.0
    %888 = vmatpush1.msra.mxu0 0.0
    %889 = vmatprep.subr.mxu0 0.0
    %890 = vmatpush1.msra.mxu0 0.0
    %891 = vmatprep.subr.mxu0 0.0
    %892 = vmatpush1.msra.mxu0 0.0
    %893 = vmatprep.subr.mxu0 0.0
    %894 = vmatpush1.msra.mxu0 0.0
    %895 = vmatprep.subr.mxu0 0.0
    %896 = vmatpush1.msra.mxu0 0.0
    %897 = vmatprep.subr.mxu0 0.0
    %898 = vmatpush1.msra.mxu0 0.0
    %899 = vmatprep.subr.mxu0 0.0
    %900 = vmatpush1.msra.mxu0 0.0
    %901 = vmatprep.subr.mxu0 0.0
    %902 = vmatpush1.msra.mxu0 0.0
    %903 = vmatprep.subr.mxu0 0.0
    %904 = vmatpush1.msra.mxu0 0.0
    %905 = vmatprep.subr.mxu0 0.0
    %906 = vmatpush1.msra.mxu0 0.0
    %907 = vmatprep.subr.mxu0 0.0
    %908 = vmatpush1.msra.mxu0 0.0
    %909 = vmatprep.subr.mxu0 0.0
    %910 = vmatpush1.msra.mxu0 0.0
    %911 = vmatprep.subr.mxu0 0.0
    %912 = vmatpush1.msra.mxu0 0.0
    %913 = vmatprep.subr.mxu0 0.0
    %914 = vmatpush1.msra.mxu0 0.0
    %915 = vmatprep.subr.mxu0 0.0
    %916 = vmatpush1.msra.mxu0 0.0
    %917 = vmatprep.subr.mxu0 0.0
    %918 = vmatpush1.msra.mxu0 0.0
    %919 = vmatprep.subr.mxu0 0.0
    %920 = vmatpush1.msra.mxu0 0.0
    %921 = vmatprep.subr.mxu0 0.0
    %922 = vmatpush1.msra.mxu0 0.0
    %923 = vmatprep.subr.mxu0 0.0
    %924 = vmatpush1.msra.mxu0 0.0
    %925 = vmatprep.subr.mxu0 0.0
    %926 = vmatpush1.msra.mxu0 0.0
    %927 = vmatprep.subr.mxu0 0.0
    %928 = vmatpush1.msra.mxu0 0.0
    %929 = vmatprep.subr.mxu0 0.0
    %930 = vmatpush1.msra.mxu0 0.0
    %931 = vmatprep.subr.mxu0 0.0
    %932 = vmatpush1.msra.mxu0 0.0
    %933 = vmatprep.mubr.f32.mxu0 0.0
    %934 = vmatmul.mubr.f32.gmra.mrb[0].mxu0 %v867
    %v935 = vpop.f32.mrb[0].mxu0
    %v936 = vadd.f32 %v862, %v935
    %v937 = vpop.f32.mrb[0].mxu0
    %v938 = vadd.f32 %v863, %v937
    %939 = vdwg.mxu0
    %v940 = vxor.u32 %v936, 2147483648
    %v941 = vmul.f32 %v940, 1.442695
    %v942 = vpow.pop %v941
    %v943 = vadd.f32 %v942, 1.0
    %v944 = vrcp.pop %v943
    %v945 = vmul.f32 1.0, %v944
    %v946 = vtanh.pop %v938
    %v947 = vxor.u32 %v938, 2147483648
    %v948 = vmul.f32 %v947, 1.442695
    %v949 = vpow.pop %v948
    %v950 = vadd.f32 %v949, 1.0
    %v951 = vrcp.pop %v950
    %v952 = vmul.f32 1.0, %v951
    %v953 = vmul.f32 %v945, %v858
    %v954 = vmul.f32 %v945, %v946
    %956 = vrot.lane.b32.xlu0 %v954, 64
    %v957 = vpop.permute.xlu0 %956
    %v959 = vadd.f32 %v953, %v957
    %v960 = vtanh.pop %v959
    %v961 = vmul.f32 %v952, %v960
    %v962 = vmax.f32 %v861, %v961
    %v963 = vld [vmem:[#allocation2 + $0x70] sm:$0xff]
    %v964 = vld [vmem:[#allocation2 + $0x78] sm:$0xff]
    %966 = vrot.lane.b32.xlu0 %v961, 64
    %v967 = vpop.permute.xlu0 %966
    %v968 = vsel %vm357, %v967, 0
    %970 = vmatprep.subr.mxu0 %v315
    %971 = vmatpush1.msra.mxu0 %v314
    %972 = vmatprep.subr.mxu0 %v317
    %973 = vmatpush1.msra.mxu0 %v316
    %974 = vmatprep.subr.mxu0 %v319
    %975 = vmatpush1.msra.mxu0 %v318
    %976 = vmatprep.subr.mxu0 %v321
    %977 = vmatpush1.msra.mxu0 %v320
    %978 = vmatprep.subr.mxu0 %v323
    %979 = vmatpush1.msra.mxu0 %v322
    %980 = vmatprep.subr.mxu0 %v325
    %981 = vmatpush1.msra.mxu0 %v324
    %982 = vmatprep.subr.mxu0 %v327
    %983 = vmatpush1.msra.mxu0 %v326
    %984 = vmatprep.subr.mxu0 %v329
    %985 = vmatpush1.msra.mxu0 %v328
    %986 = vmatprep.subr.mxu0 0.0
    %987 = vmatpush1.msra.mxu0 0.0
    %988 = vmatprep.subr.mxu0 0.0
    %989 = vmatpush1.msra.mxu0 0.0
    %990 = vmatprep.subr.mxu0 0.0
    %991 = vmatpush1.msra.mxu0 0.0
    %992 = vmatprep.subr.mxu0 0.0
    %993 = vmatpush1.msra.mxu0 0.0
    %994 = vmatprep.subr.mxu0 0.0
    %995 = vmatpush1.msra.mxu0 0.0
    %996 = vmatprep.subr.mxu0 0.0
    %997 = vmatpush1.msra.mxu0 0.0
    %998 = vmatprep.subr.mxu0 0.0
    %999 = vmatpush1.msra.mxu0 0.0
    %1000 = vmatprep.subr.mxu0 0.0
    %1001 = vmatpush1.msra.mxu0 0.0
    %1002 = vmatprep.subr.mxu0 0.0
    %1003 = vmatpush1.msra.mxu0 0.0
    %1004 = vmatprep.subr.mxu0 0.0
    %1005 = vmatpush1.msra.mxu0 0.0
    %1006 = vmatprep.subr.mxu0 0.0
    %1007 = vmatpush1.msra.mxu0 0.0
    %1008 = vmatprep.subr.mxu0 0.0
    %1009 = vmatpush1.msra.mxu0 0.0
    %1010 = vmatprep.subr.mxu0 0.0
    %1011 = vmatpush1.msra.mxu0 0.0
    %1012 = vmatprep.subr.mxu0 0.0
    %1013 = vmatpush1.msra.mxu0 0.0
    %1014 = vmatprep.subr.mxu0 0.0
    %1015 = vmatpush1.msra.mxu0 0.0
    %1016 = vmatprep.subr.mxu0 0.0
    %1017 = vmatpush1.msra.mxu0 0.0
    %1018 = vmatprep.subr.mxu0 0.0
    %1019 = vmatpush1.msra.mxu0 0.0
    %1020 = vmatprep.subr.mxu0 0.0
    %1021 = vmatpush1.msra.mxu0 0.0
    %1022 = vmatprep.subr.mxu0 0.0
    %1023 = vmatpush1.msra.mxu0 0.0
    %1024 = vmatprep.subr.mxu0 0.0
    %1025 = vmatpush1.msra.mxu0 0.0
    %1026 = vmatprep.subr.mxu0 0.0
    %1027 = vmatpush1.msra.mxu0 0.0
    %1028 = vmatprep.subr.mxu0 0.0
    %1029 = vmatpush1.msra.mxu0 0.0
    %1030 = vmatprep.subr.mxu0 0.0
    %1031 = vmatpush1.msra.mxu0 0.0
    %1032 = vmatprep.subr.mxu0 0.0
    %1033 = vmatpush1.msra.mxu0 0.0
    %1034 = vmatprep.mubr.f32.mxu0 0.0
    %1035 = vmatmul.mubr.f32.gmra.mrb[0].mxu0 %v968
    %v1036 = vpop.f32.mrb[0].mxu0
    %v1037 = vadd.f32 %v963, %v1036
    %v1038 = vpop.f32.mrb[0].mxu0
    %v1039 = vadd.f32 %v964, %v1038
    %1040 = vdwg.mxu0
    %v1041 = vxor.u32 %v1037, 2147483648
    %v1042 = vmul.f32 %v1041, 1.442695
    %v1043 = vpow.pop %v1042
    %v1044 = vadd.f32 %v1043, 1.0
    %v1045 = vrcp.pop %v1044
    %v1046 = vmul.f32 1.0, %v1045
    %v1047 = vtanh.pop %v1039
    %v1048 = vxor.u32 %v1039, 2147483648
    %v1049 = vmul.f32 %v1048, 1.442695
    %v1050 = vpow.pop %v1049
    %v1051 = vadd.f32 %v1050, 1.0
    %v1052 = vrcp.pop %v1051
    %v1053 = vmul.f32 1.0, %v1052
    %v1054 = vmul.f32 %v1046, %v959
    %v1055 = vmul.f32 %v1046, %v1047
    %1057 = vrot.lane.b32.xlu0 %v1055, 64
    %v1058 = vpop.permute.xlu0 %1057
    %v1060 = vadd.f32 %v1054, %v1058
    %v1061 = vtanh.pop %v1060
    %v1062 = vmul.f32 %v1053, %v1061
    %v1063 = vmax.f32 %v962, %v1062
    %v1064 = vtanh.pop %v1063
    %v1065 = vld [vmem:[%s4] sm:$0xff]
    %v1066 = vld [vmem:[%s4 + $0x8] sm:$0xff]
    %v1067 = vld [vmem:[%s4 + $0x10] sm:$0xff]
    %v1068 = vld [vmem:[%s4 + $0x18] sm:$0xff]
    %v1069 = vld [vmem:[%s4 + $0x20] sm:$0xff]
    %v1070 = vld [vmem:[%s4 + $0x28] sm:$0xff]
    %v1071 = vld [vmem:[%s4 + $0x30] sm:$0xff]
    %v1072 = vld [vmem:[%s4 + $0x38] sm:$0xff]
    %v1073 = vld [vmem:[%s5] sm:$0x1]
    %v1075 = vlaneseq
    %v1076 = vshrl.u32 %v1075, 7
    %v1077 = vsub.s32 0, %v1076
    %v1078 = vrot.slane %v1073, %v1077
    %1081 = vrot.lane.b32.xlu0 %v1064, 64
    %v1082 = vpop.permute.xlu0 %1081
    %v1083 = vsel %vm357, %v1082, 0
    %1085 = vmatprep.subr.mxu0 0.0
    %1086 = vmatpush1.msra.mxu0 %v1065
    %1087 = vmatprep.subr.mxu0 0.0
    %1088 = vmatpush1.msra.mxu0 %v1066
    %1089 = vmatprep.subr.mxu0 0.0
    %1090 = vmatpush1.msra.mxu0 %v1067
    %1091 = vmatprep.subr.mxu0 0.0
    %1092 = vmatpush1.msra.mxu0 %v1068
    %1093 = vmatprep.subr.mxu0 0.0
    %1094 = vmatpush1.msra.mxu0 %v1069
    %1095 = vmatprep.subr.mxu0 0.0
    %1096 = vmatpush1.msra.mxu0 %v1070
    %1097 = vmatprep.subr.mxu0 0.0
    %1098 = vmatpush1.msra.mxu0 %v1071
    %1099 = vmatprep.subr.mxu0 0.0
    %1100 = vmatpush1.msra.mxu0 %v1072
    %1101 = vmatprep.subr.mxu0 0.0
    %1102 = vmatpush1.msra.mxu0 0.0
    %1103 = vmatprep.subr.mxu0 0.0
    %1104 = vmatpush1.msra.mxu0 0.0
    %1105 = vmatprep.subr.mxu0 0.0
    %1106 = vmatpush1.msra.mxu0 0.0
    %1107 = vmatprep.subr.mxu0 0.0
    %1108 = vmatpush1.msra.mxu0 0.0
    %1109 = vmatprep.subr.mxu0 0.0
    %1110 = vmatpush1.msra.mxu0 0.0
    %1111 = vmatprep.subr.mxu0 0.0
    %1112 = vmatpush1.msra.mxu0 0.0
    %1113 = vmatprep.subr.mxu0 0.0
    %1114 = vmatpush1.msra.mxu0 0.0
    %1115 = vmatprep.subr.mxu0 0.0
    %1116 = vmatpush1.msra.mxu0 0.0
    %1117 = vmatprep.subr.mxu0 0.0
    %1118 = vmatpush1.msra.mxu0 0.0
    %1119 = vmatprep.subr.mxu0 0.0
    %1120 = vmatpush1.msra.mxu0 0.0
    %1121 = vmatprep.subr.mxu0 0.0
    %1122 = vmatpush1.msra.mxu0 0.0
    %1123 = vmatprep.subr.mxu0 0.0
    %1124 = vmatpush1.msra.mxu0 0.0
    %1125 = vmatprep.subr.mxu0 0.0
    %1126 = vmatpush1.msra.mxu0 0.0
    %1127 = vmatprep.subr.mxu0 0.0
    %1128 = vmatpush1.msra.mxu0 0.0
    %1129 = vmatprep.subr.mxu0 0.0
    %1130 = vmatpush1.msra.mxu0 0.0
    %1131 = vmatprep.subr.mxu0 0.0
    %1132 = vmatpush1.msra.mxu0 0.0
    %1133 = vmatprep.subr.mxu0 0.0
    %1134 = vmatpush1.msra.mxu0 0.0
    %1135 = vmatprep.subr.mxu0 0.0
    %1136 = vmatpush1.msra.mxu0 0.0
    %1137 = vmatprep.subr.mxu0 0.0
    %1138 = vmatpush1.msra.mxu0 0.0
    %1139 = vmatprep.subr.mxu0 0.0
    %1140 = vmatpush1.msra.mxu0 0.0
    %1141 = vmatprep.subr.mxu0 0.0
    %1142 = vmatpush1.msra.mxu0 0.0
    %1143 = vmatprep.subr.mxu0 0.0
    %1144 = vmatpush1.msra.mxu0 0.0
    %1145 = vmatprep.subr.mxu0 0.0
    %1146 = vmatpush1.msra.mxu0 0.0
    %1147 = vmatprep.subr.mxu0 0.0
    %1148 = vmatpush1.msra.mxu0 0.0
    %1149 = vmatprep.mubr.f32.mxu0 0.0
    %1150 = vmatmul.mubr.f32.gmra.mrb[0].mxu0 %v1083
    %v1151 = vpop.f32.mrb[0].mxu0
    %v1152 = vadd.f32 %v1078, %v1151
    %v1153 = vpop.f32.mrb[0].mxu0
    %1154 = vdwg.mxu0
    %vm1155 = vcmask 31744
    %v1156 = vsel %vm1155, %v1152, -inf
    %1157 = vmax.xlane.f32.xlu0 %v1156
    %v1158 = vpop.xlane.xlu0 %1157
    %v1159 = vsub.f32 %v1152, %v1158
    %v1160 = vmul.f32 %v1159, 1.442695
    %v1161 = vpow.pop %v1160
    %v1162 = vsel %vm1155, %v1161, 0.0
    %1163 = vadd.xlane.f32.xlu0 %v1162
    %v1164 = vpop.xlane.xlu0 %1163
    %v1165 = vrcp.pop %v1164
    %v1166 = vmul.f32 %v1161, %v1165
    %vm1167 = vcmask 25600
    %1168 = vst.msk [vmem:[#allocation6] sm:$0x3] %vm1167, %v1166
    // Predicated region
    $region30: #{tpu_custom_call.1} parent=1 // pred_check
      _
    $region31: #{tpu_custom_call.1} parent=1 // pred_check_branch
      %1170 = sbr.rel (0) target = $region33
    $region32: #{tpu_custom_call.1} parent=1 // pred_region
      %s1172 = ssub.s32 32, 32
      %1173 = vsyncadd [#allocation5], %s1172
      %s1175 = sshll.u32 [#allocation6], 4
      %s1176 = int_to_ptr.vmem [resolvable:$true] %s1175
      %1178 = dma.vmem_to_hbm [thread:$0]  %s1176, 32, %s6, [#allocation5]
    $region33: #{tpu_custom_call.1} parent=1 // pred_fallthru
      _
    // Predicated region
    $region34: #{tpu_custom_call.1} parent=1 // pred_check
      _
    $region35: #{tpu_custom_call.1} parent=1 // pred_check_branch
      %1180 = sbr.rel (0) target = $region37
    $region36: #{tpu_custom_call.1} parent=1 // pred_region
      %1181 = dma.done [#allocation5], 32
    $region37: #{tpu_custom_call.1} parent=1 // pred_fallthru
      _
    %1182 = vsyncpa [#allocation4], 1
    %1183 = vsyncpa [#allocation5], 1

</llo_original>
